<compile_context>
chip_gen: v5e
topology: v5e:2x2
jax: 0.10.0
libtpu: 0.0.40
codegen_flags: <defaults>
</compile_context>

<pallas_src>
import math
import functools

import jax
import jax.numpy as jnp
from jax.experimental import pallas as pl
from jax.experimental.pallas import tpu as pltpu


def _mha_kernel(q_ref, k_ref, v_ref,
                wq_ref, bq_ref, wk_ref, bk_ref, wv_ref, bv_ref,
                wo_ref, bo_ref,
                o_ref,
                *, heads: int, d_k: int):
    TB, S, D = q_ref.shape
    cdt = wq_ref.dtype          # MXU compute dtype (bf16 or f32), set in wrapper.

    # Flatten (TB, S) rows so each projection is ONE big MXU matmul
    # (full D contraction, lane-dense 128-multiple output).
    xq = q_ref[...].reshape(TB * S, D)
    xk = k_ref[...].reshape(TB * S, D)
    xv = v_ref[...].reshape(TB * S, D)

    # Input projections. Weights arrive pre-transposed as [in, out] -> no .T here.
    # f32 accumulation; biases added in f32.
    q = jnp.dot(xq, wq_ref[...], preferred_element_type=jnp.float32) + bq_ref[...]
    k = jnp.dot(xk, wk_ref[...], preferred_element_type=jnp.float32) + bk_ref[...]
    v = jnp.dot(xv, wv_ref[...], preferred_element_type=jnp.float32) + bv_ref[...]

    q3 = q.reshape(TB, S, D).astype(cdt)
    k3 = k.reshape(TB, S, D).astype(cdt)
    v3 = v.reshape(TB, S, D).astype(cdt)

    scale = 1.0 / math.sqrt(d_k)

    # out = concat_h(ctx_h) @ Wo^T + bo  ==  bo + sum_h ctx_h @ Wo^T[h*d_k:(h+1)*d_k, :]
    # (removes the lane-axis concat; the small head loop is unrolled at trace time).
    out = jnp.zeros((TB * S, D), jnp.float32) + bo_ref[...]
    for h in range(heads):
        lo = h * d_k
        qh = q3[:, :, lo:lo + d_k]          # (TB, S, d_k)
        kh = k3[:, :, lo:lo + d_k]
        vh = v3[:, :, lo:lo + d_k]

        # Scores + softmax in f32 (numerics match torch softmax).
        s = jnp.einsum("bqd,bkd->bqk", qh, kh,
                       preferred_element_type=jnp.float32) * scale
        s = s - jnp.max(s, axis=-1, keepdims=True)
        p = jnp.exp(s)
        p = p * pl.reciprocal(jnp.sum(p, axis=-1, keepdims=True), approx=True)

        ctx = jnp.einsum("bqk,bkd->bqd", p.astype(cdt), vh,
                         preferred_element_type=jnp.float32)   # (TB, S, d_k)

        out = out + jnp.dot(ctx.reshape(TB * S, d_k).astype(cdt),
                            wo_ref[lo:lo + d_k, :],
                            preferred_element_type=jnp.float32)

    o_ref[...] = out.reshape(TB, S, D).astype(o_ref.dtype)


def _pick_batch_block(B, S, D, itemsize, max_block_bytes=4 << 20):
    """Largest batch block that divides B, keeps a per-step activation block
    within a VMEM-friendly budget, and (when possible) leaves >=2 grid steps
    so both TensorCores on v7x get work."""
    divisors = [tb for tb in range(1, B + 1) if B % tb == 0]
    fits = [tb for tb in divisors if tb * S * D * itemsize <= max_block_bytes]
    if not fits:
        return 1
    two_steps = [tb for tb in fits if B // tb >= 2]
    return max(two_steps) if two_steps else max(fits)


def multi_head_attention(q, k, v, params, *, heads: int,
                         batch_block=None, use_bf16=True):
    """q, k, v: [B, S, d_model] float32.  params: PyTorch-convention weights."""
    B, S, D = q.shape
    assert D % heads == 0, "d_model must be divisible by heads"
    assert S % 8 == 0, "sequence length must be a multiple of 8 (sublane tiling)"
    d_k = D // heads

    cdt = jnp.bfloat16 if use_bf16 else jnp.float32

    # Pre-transpose W [out, in] -> [in, out] once, cast MXU operands to the
    # compute dtype; biases stay f32 (added after f32 accumulation).
    def w_t(name):
        return jnp.asarray(params[name]).T.astype(cdt)

    def b_2d(name):
        return jnp.asarray(params[name]).reshape(1, D).astype(jnp.float32)

    wq, wk, wv, wo = w_t("wq"), w_t("wk"), w_t("wv"), w_t("wo")
    bq, bk, bv, bo = b_2d("bq"), b_2d("bk"), b_2d("bv"), b_2d("bo")

    qc = q.astype(cdt)
    kc = k.astype(cdt)
    vc = v.astype(cdt)

    if batch_block is None:
        batch_block = _pick_batch_block(B, S, D, jnp.dtype(cdt).itemsize)
    TB = batch_block
    assert B % TB == 0, "batch_block must divide batch size"
    grid = (B // TB,)

    act_spec = pl.BlockSpec((TB, S, D), lambda b: (b, 0, 0))
    w_spec = pl.BlockSpec((D, D), lambda b: (0, 0))
    b_spec = pl.BlockSpec((1, D), lambda b: (0, 0))

    flops = 2 * B * (4 * S * D * D + 2 * S * S * D)
    bytes_accessed = ((3 * B * S * D + 4 * D * D) * jnp.dtype(cdt).itemsize
                      + (B * S * D + 4 * D) * 4)
    cost = pl.CostEstimate(flops=flops,
                           transcendentals=B * heads * S * S,
                           bytes_accessed=bytes_accessed)

    kernel = functools.partial(_mha_kernel, heads=heads, d_k=d_k)

    return pl.pallas_call(
        kernel,
        out_shape=jax.ShapeDtypeStruct((B, S, D), jnp.float32),
        grid_spec=pltpu.PrefetchScalarGridSpec(
            num_scalar_prefetch=0,
            grid=grid,
            in_specs=[act_spec, act_spec, act_spec,
                      w_spec, b_spec, w_spec, b_spec, w_spec, b_spec,
                      w_spec, b_spec],
            out_specs=act_spec,
        ),
        compiler_params=pltpu.CompilerParams(
            dimension_semantics=("parallel",)),
        cost_estimate=cost,
    )(qc, kc, vc, wq, bq, wk, bk, wv, bv, wo, bo)


def _reference_mha(q, k, v, params, *, heads: int, cast_dtype=jnp.float32):
    """Pure-JAX reference matching the PyTorch forward (mask=None, eval mode).
    cast_dtype lets the reference use the same MXU input precision as the kernel."""
    B, S, D = q.shape
    d_k = D // heads
    c = lambda x: x.astype(cast_dtype)

    def lin(x, w, b):
        y = jnp.einsum("bsd,ed->bse", c(x), c(w),
                       preferred_element_type=jnp.float32)
        return y + b.reshape(1, 1, D)

    qp = lin(q, params["wq"], params["bq"]).reshape(B, S, heads, d_k).transpose(0, 2, 1, 3)
    kp = lin(k, params["wk"], params["bk"]).reshape(B, S, heads, d_k).transpose(0, 2, 1, 3)
    vp = lin(v, params["wv"], params["bv"]).reshape(B, S, heads, d_k).transpose(0, 2, 1, 3)

    scores = jnp.einsum("bhqd,bhkd->bhqk", c(qp), c(kp),
                        preferred_element_type=jnp.float32) / math.sqrt(d_k)
    probs = jax.nn.softmax(scores, axis=-1)
    ctx = jnp.einsum("bhqk,bhkd->bhqd", c(probs), c(vp),
                     preferred_element_type=jnp.float32)
    concat = ctx.transpose(0, 2, 1, 3).reshape(B, S, D)
    return lin(concat, params["wo"], params["bo"])


def _init_params(key, d_model):
    # Deterministic nn.Linear-style uniform(-1/sqrt(in), 1/sqrt(in)) init.
    bound = 1.0 / math.sqrt(d_model)
    keys = jax.random.split(key, 8)

    def u(k, shape):
        return jax.random.uniform(k, shape, jnp.float32, -bound, bound)

    return {
        "wq": u(keys[0], (d_model, d_model)), "bq": u(keys[1], (d_model,)),
        "wk": u(keys[2], (d_model, d_model)), "bk": u(keys[3], (d_model,)),
        "wv": u(keys[4], (d_model, d_model)), "bv": u(keys[5], (d_model,)),
        "wo": u(keys[6], (d_model, d_model)), "bo": u(keys[7], (d_model,)),
    }


if __name__ == "__main__":
    # d_model=128 so activation/output blocks are lane-dense (multiple of 128).
    B, S, d_model, heads = 4, 16, 128, 4

    root = jax.random.PRNGKey(0)
    kq, kk, kv, kp = jax.random.split(root, 4)
    q = jax.random.normal(kq, (B, S, d_model), jnp.float32)
    k = jax.random.normal(kk, (B, S, d_model), jnp.float32)
    v = jax.random.normal(kv, (B, S, d_model), jnp.float32)
    params = _init_params(kp, d_model)

    out = multi_head_attention(q, k, v, params, heads=heads, use_bf16=True)
    out = jax.block_until_ready(out)

    # Compare against a reference that also uses bf16 MXU inputs (same precision
    # regime as the kernel); remaining delta is approx-reciprocal + accumulation order.
    ref = _reference_mha(q, k, v, params, heads=heads, cast_dtype=jnp.bfloat16)
    assert out.shape == (B, S, d_model)
    max_err = jnp.max(jnp.abs(out - ref))
    assert jnp.allclose(out, ref, atol=2e-2, rtol=2e-2), f"max abs err {max_err}"

    print("KERNEL_OK")
</pallas_src>

<mosaic_0001>
module attributes {stable_mosaic.version = 11 : i64} {
  func.func @_mha_kernel(%arg0: i32, %arg1: memref<2x16x128xbf16, #tpu.memory_space<vmem>>, %arg2: memref<2x16x128xbf16, #tpu.memory_space<vmem>>, %arg3: memref<2x16x128xbf16, #tpu.memory_space<vmem>>, %arg4: memref<128x128xbf16, #tpu.memory_space<vmem>>, %arg5: memref<1x128xf32, #tpu.memory_space<vmem>>, %arg6: memref<128x128xbf16, #tpu.memory_space<vmem>>, %arg7: memref<1x128xf32, #tpu.memory_space<vmem>>, %arg8: memref<128x128xbf16, #tpu.memory_space<vmem>>, %arg9: memref<1x128xf32, #tpu.memory_space<vmem>>, %arg10: memref<128x128xbf16, #tpu.memory_space<vmem>>, %arg11: memref<1x128xf32, #tpu.memory_space<vmem>>, %arg12: memref<2x16x128xf32, #tpu.memory_space<vmem>>) attributes {dimension_semantics = [#tpu.dimension_semantics<parallel>], iteration_bounds = array<i64: 2>, scalar_prefetch = 0 : i64, scratch_operands = 0 : i64, tpu.core_type = #tpu.core_type<tc>, window_params = [{transform_indices = @transform_0, window_bounds = array<i64: 2, 16, 128>}, {transform_indices = @transform_1, window_bounds = array<i64: 2, 16, 128>}, {transform_indices = @transform_2, window_bounds = array<i64: 2, 16, 128>}, {pipeline_mode = #tpu.pipeline_mode<synchronous>, transform_indices = @transform_3, window_bounds = array<i64: 128, 128>}, {pipeline_mode = #tpu.pipeline_mode<synchronous>, transform_indices = @transform_4, window_bounds = array<i64: 1, 128>}, {pipeline_mode = #tpu.pipeline_mode<synchronous>, transform_indices = @transform_5, window_bounds = array<i64: 128, 128>}, {pipeline_mode = #tpu.pipeline_mode<synchronous>, transform_indices = @transform_6, window_bounds = array<i64: 1, 128>}, {pipeline_mode = #tpu.pipeline_mode<synchronous>, transform_indices = @transform_7, window_bounds = array<i64: 128, 128>}, {pipeline_mode = #tpu.pipeline_mode<synchronous>, transform_indices = @transform_8, window_bounds = array<i64: 1, 128>}, {pipeline_mode = #tpu.pipeline_mode<synchronous>, transform_indices = @transform_9, window_bounds = array<i64: 128, 128>}, {pipeline_mode = #tpu.pipeline_mode<synchronous>, transform_indices = @transform_10, window_bounds = array<i64: 1, 128>}, {transform_indices = @transform_11, window_bounds = array<i64: 2, 16, 128>}]} {
    %c0 = arith.constant 0 : index
    %c0_0 = arith.constant 0 : index
    %c0_1 = arith.constant 0 : index
    %0 = vector.load %arg1[%c0, %c0_0, %c0_1] : memref<2x16x128xbf16, #tpu.memory_space<vmem>>, vector<2x16x128xbf16>
    %1 = vector.shape_cast %0 : vector<2x16x128xbf16> to vector<32x128xbf16>
    %c0_2 = arith.constant 0 : index
    %c0_3 = arith.constant 0 : index
    %c0_4 = arith.constant 0 : index
    %2 = vector.load %arg2[%c0_2, %c0_3, %c0_4] : memref<2x16x128xbf16, #tpu.memory_space<vmem>>, vector<2x16x128xbf16>
    %3 = vector.shape_cast %2 : vector<2x16x128xbf16> to vector<32x128xbf16>
    %c0_5 = arith.constant 0 : index
    %c0_6 = arith.constant 0 : index
    %c0_7 = arith.constant 0 : index
    %4 = vector.load %arg3[%c0_5, %c0_6, %c0_7] : memref<2x16x128xbf16, #tpu.memory_space<vmem>>, vector<2x16x128xbf16>
    %5 = vector.shape_cast %4 : vector<2x16x128xbf16> to vector<32x128xbf16>
    %c0_8 = arith.constant 0 : index
    %c0_9 = arith.constant 0 : index
    %6 = vector.load %arg4[%c0_8, %c0_9] : memref<128x128xbf16, #tpu.memory_space<vmem>>, vector<128x128xbf16>
    %cst = arith.constant dense<0.000000e+00> : vector<32x128xf32>
    %7 = tpu.matmul %1, %6, %cst {dimension_numbers = #tpu.dot_dimension_numbers<[1], [0], [0], [1], [0, 0, 1, 1], [], []>} : vector<32x128xbf16>, vector<128x128xbf16>, vector<32x128xf32> -> vector<32x128xf32>
    %c0_10 = arith.constant 0 : index
    %c0_11 = arith.constant 0 : index
    %8 = vector.load %arg5[%c0_10, %c0_11] : memref<1x128xf32, #tpu.memory_space<vmem>>, vector<1x128xf32>
    %9 = vector.broadcast %8 : vector<1x128xf32> to vector<32x128xf32>
    %10 = arith.addf %7, %9 : vector<32x128xf32>
    %c0_12 = arith.constant 0 : index
    %c0_13 = arith.constant 0 : index
    %11 = vector.load %arg6[%c0_12, %c0_13] : memref<128x128xbf16, #tpu.memory_space<vmem>>, vector<128x128xbf16>
    %cst_14 = arith.constant dense<0.000000e+00> : vector<32x128xf32>
    %12 = tpu.matmul %3, %11, %cst_14 {dimension_numbers = #tpu.dot_dimension_numbers<[1], [0], [0], [1], [0, 0, 1, 1], [], []>} : vector<32x128xbf16>, vector<128x128xbf16>, vector<32x128xf32> -> vector<32x128xf32>
    %c0_15 = arith.constant 0 : index
    %c0_16 = arith.constant 0 : index
    %13 = vector.load %arg7[%c0_15, %c0_16] : memref<1x128xf32, #tpu.memory_space<vmem>>, vector<1x128xf32>
    %14 = vector.broadcast %13 : vector<1x128xf32> to vector<32x128xf32>
    %15 = arith.addf %12, %14 : vector<32x128xf32>
    %c0_17 = arith.constant 0 : index
    %c0_18 = arith.constant 0 : index
    %16 = vector.load %arg8[%c0_17, %c0_18] : memref<128x128xbf16, #tpu.memory_space<vmem>>, vector<128x128xbf16>
    %cst_19 = arith.constant dense<0.000000e+00> : vector<32x128xf32>
    %17 = tpu.matmul %5, %16, %cst_19 {dimension_numbers = #tpu.dot_dimension_numbers<[1], [0], [0], [1], [0, 0, 1, 1], [], []>} : vector<32x128xbf16>, vector<128x128xbf16>, vector<32x128xf32> -> vector<32x128xf32>
    %c0_20 = arith.constant 0 : index
    %c0_21 = arith.constant 0 : index
    %18 = vector.load %arg9[%c0_20, %c0_21] : memref<1x128xf32, #tpu.memory_space<vmem>>, vector<1x128xf32>
    %19 = vector.broadcast %18 : vector<1x128xf32> to vector<32x128xf32>
    %20 = arith.addf %17, %19 : vector<32x128xf32>
    %21 = vector.shape_cast %10 : vector<32x128xf32> to vector<2x16x128xf32>
    %22 = arith.truncf %21 : vector<2x16x128xf32> to vector<2x16x128xbf16>
    %23 = vector.shape_cast %15 : vector<32x128xf32> to vector<2x16x128xf32>
    %24 = arith.truncf %23 : vector<2x16x128xf32> to vector<2x16x128xbf16>
    %25 = vector.shape_cast %20 : vector<32x128xf32> to vector<2x16x128xf32>
    %26 = arith.truncf %25 : vector<2x16x128xf32> to vector<2x16x128xbf16>
    %cst_22 = arith.constant 0.000000e+00 : f32
    %27 = vector.broadcast %cst_22 : f32 to vector<32x128xf32>
    %c0_23 = arith.constant 0 : index
    %c0_24 = arith.constant 0 : index
    %28 = vector.load %arg11[%c0_23, %c0_24] : memref<1x128xf32, #tpu.memory_space<vmem>>, vector<1x128xf32>
    %29 = vector.broadcast %28 : vector<1x128xf32> to vector<32x128xf32>
    %30 = arith.addf %27, %29 : vector<32x128xf32>
    %31 = vector.extract_strided_slice %22 {offsets = [0, 0, 0], sizes = [2, 16, 32], strides = [1, 1, 1]} : vector<2x16x128xbf16> to vector<2x16x32xbf16>
    %32 = vector.extract_strided_slice %24 {offsets = [0, 0, 0], sizes = [2, 16, 32], strides = [1, 1, 1]} : vector<2x16x128xbf16> to vector<2x16x32xbf16>
    %33 = vector.extract_strided_slice %26 {offsets = [0, 0, 0], sizes = [2, 16, 32], strides = [1, 1, 1]} : vector<2x16x128xbf16> to vector<2x16x32xbf16>
    "tpu.trace_start"() <{level = 10 : i32, message = "bqd,bkd->bqk"}> : () -> ()
    %cst_25 = arith.constant dense<0.000000e+00> : vector<2x16x16xf32>
    %34 = tpu.matmul %31, %32, %cst_25 {dimension_numbers = #tpu.dot_dimension_numbers<[2], [2], [1], [1], [0, 0, 0, 1, 1, 1], [0], [0]>} : vector<2x16x32xbf16>, vector<2x16x32xbf16>, vector<2x16x16xf32> -> vector<2x16x16xf32>
    "tpu.trace_stop"() : () -> ()
    %cst_26 = arith.constant 0.176776692 : f32
    %35 = vector.broadcast %cst_26 : f32 to vector<2x16x16xf32>
    %36 = arith.mulf %34, %35 : vector<2x16x16xf32>
    %cst_27 = arith.constant dense<0xFF800000> : vector<2x16xf32>
    %37 = vector.multi_reduction <maximumf>, %36, %cst_27 [2] : vector<2x16x16xf32> to vector<2x16xf32>
    %38 = vector.shape_cast %37 : vector<2x16xf32> to vector<2x16x1xf32>
    %39 = vector.broadcast %38 : vector<2x16x1xf32> to vector<2x16x16xf32>
    %40 = arith.subf %36, %39 : vector<2x16x16xf32>
    %41 = math.exp %40 : vector<2x16x16xf32>
    %cst_28 = arith.constant dense<0.000000e+00> : vector<2x16xf32>
    %42 = vector.multi_reduction <add>, %41, %cst_28 [2] : vector<2x16x16xf32> to vector<2x16xf32>
    %43 = vector.shape_cast %42 : vector<2x16xf32> to vector<2x16x1xf32>
    %44 = tpu.reciprocal %43 {approx = true} : vector<2x16x1xf32> -> vector<2x16x1xf32>
    %45 = vector.broadcast %44 : vector<2x16x1xf32> to vector<2x16x16xf32>
    %46 = arith.mulf %41, %45 : vector<2x16x16xf32>
    %47 = arith.truncf %46 : vector<2x16x16xf32> to vector<2x16x16xbf16>
    "tpu.trace_start"() <{level = 10 : i32, message = "bqk,bkd->bqd"}> : () -> ()
    %cst_29 = arith.constant dense<0.000000e+00> : vector<2x16x32xf32>
    %48 = tpu.matmul %47, %33, %cst_29 {dimension_numbers = #tpu.dot_dimension_numbers<[2], [1], [1], [2], [0, 0, 0, 1, 1, 2], [0], [0]>} : vector<2x16x16xbf16>, vector<2x16x32xbf16>, vector<2x16x32xf32> -> vector<2x16x32xf32>
    "tpu.trace_stop"() : () -> ()
    %49 = vector.shape_cast %48 : vector<2x16x32xf32> to vector<32x32xf32>
    %50 = arith.truncf %49 : vector<32x32xf32> to vector<32x32xbf16>
    %c0_30 = arith.constant 0 : index
    %c0_31 = arith.constant 0 : index
    %51 = vector.load %arg10[%c0_30, %c0_31] : memref<128x128xbf16, #tpu.memory_space<vmem>>, vector<32x128xbf16>
    %cst_32 = arith.constant dense<0.000000e+00> : vector<32x128xf32>
    %52 = tpu.matmul %50, %51, %cst_32 {dimension_numbers = #tpu.dot_dimension_numbers<[1], [0], [0], [1], [0, 0, 1, 1], [], []>} : vector<32x32xbf16>, vector<32x128xbf16>, vector<32x128xf32> -> vector<32x128xf32>
    %53 = arith.addf %30, %52 : vector<32x128xf32>
    %54 = vector.extract_strided_slice %22 {offsets = [0, 0, 32], sizes = [2, 16, 32], strides = [1, 1, 1]} : vector<2x16x128xbf16> to vector<2x16x32xbf16>
    %55 = vector.extract_strided_slice %24 {offsets = [0, 0, 32], sizes = [2, 16, 32], strides = [1, 1, 1]} : vector<2x16x128xbf16> to vector<2x16x32xbf16>
    %56 = vector.extract_strided_slice %26 {offsets = [0, 0, 32], sizes = [2, 16, 32], strides = [1, 1, 1]} : vector<2x16x128xbf16> to vector<2x16x32xbf16>
    "tpu.trace_start"() <{level = 10 : i32, message = "bqd,bkd->bqk"}> : () -> ()
    %cst_33 = arith.constant dense<0.000000e+00> : vector<2x16x16xf32>
    %57 = tpu.matmul %54, %55, %cst_33 {dimension_numbers = #tpu.dot_dimension_numbers<[2], [2], [1], [1], [0, 0, 0, 1, 1, 1], [0], [0]>} : vector<2x16x32xbf16>, vector<2x16x32xbf16>, vector<2x16x16xf32> -> vector<2x16x16xf32>
    "tpu.trace_stop"() : () -> ()
    %cst_34 = arith.constant 0.176776692 : f32
    %58 = vector.broadcast %cst_34 : f32 to vector<2x16x16xf32>
    %59 = arith.mulf %57, %58 : vector<2x16x16xf32>
    %cst_35 = arith.constant dense<0xFF800000> : vector<2x16xf32>
    %60 = vector.multi_reduction <maximumf>, %59, %cst_35 [2] : vector<2x16x16xf32> to vector<2x16xf32>
    %61 = vector.shape_cast %60 : vector<2x16xf32> to vector<2x16x1xf32>
    %62 = vector.broadcast %61 : vector<2x16x1xf32> to vector<2x16x16xf32>
    %63 = arith.subf %59, %62 : vector<2x16x16xf32>
    %64 = math.exp %63 : vector<2x16x16xf32>
    %cst_36 = arith.constant dense<0.000000e+00> : vector<2x16xf32>
    %65 = vector.multi_reduction <add>, %64, %cst_36 [2] : vector<2x16x16xf32> to vector<2x16xf32>
    %66 = vector.shape_cast %65 : vector<2x16xf32> to vector<2x16x1xf32>
    %67 = tpu.reciprocal %66 {approx = true} : vector<2x16x1xf32> -> vector<2x16x1xf32>
    %68 = vector.broadcast %67 : vector<2x16x1xf32> to vector<2x16x16xf32>
    %69 = arith.mulf %64, %68 : vector<2x16x16xf32>
    %70 = arith.truncf %69 : vector<2x16x16xf32> to vector<2x16x16xbf16>
    "tpu.trace_start"() <{level = 10 : i32, message = "bqk,bkd->bqd"}> : () -> ()
    %cst_37 = arith.constant dense<0.000000e+00> : vector<2x16x32xf32>
    %71 = tpu.matmul %70, %56, %cst_37 {dimension_numbers = #tpu.dot_dimension_numbers<[2], [1], [1], [2], [0, 0, 0, 1, 1, 2], [0], [0]>} : vector<2x16x16xbf16>, vector<2x16x32xbf16>, vector<2x16x32xf32> -> vector<2x16x32xf32>
    "tpu.trace_stop"() : () -> ()
    %72 = vector.shape_cast %71 : vector<2x16x32xf32> to vector<32x32xf32>
    %73 = arith.truncf %72 : vector<32x32xf32> to vector<32x32xbf16>
    %c32 = arith.constant 32 : index
    %c0_38 = arith.constant 0 : index
    %74 = vector.load %arg10[%c32, %c0_38] : memref<128x128xbf16, #tpu.memory_space<vmem>>, vector<32x128xbf16>
    %cst_39 = arith.constant dense<0.000000e+00> : vector<32x128xf32>
    %75 = tpu.matmul %73, %74, %cst_39 {dimension_numbers = #tpu.dot_dimension_numbers<[1], [0], [0], [1], [0, 0, 1, 1], [], []>} : vector<32x32xbf16>, vector<32x128xbf16>, vector<32x128xf32> -> vector<32x128xf32>
    %76 = arith.addf %53, %75 : vector<32x128xf32>
    %77 = vector.extract_strided_slice %22 {offsets = [0, 0, 64], sizes = [2, 16, 32], strides = [1, 1, 1]} : vector<2x16x128xbf16> to vector<2x16x32xbf16>
    %78 = vector.extract_strided_slice %24 {offsets = [0, 0, 64], sizes = [2, 16, 32], strides = [1, 1, 1]} : vector<2x16x128xbf16> to vector<2x16x32xbf16>
    %79 = vector.extract_strided_slice %26 {offsets = [0, 0, 64], sizes = [2, 16, 32], strides = [1, 1, 1]} : vector<2x16x128xbf16> to vector<2x16x32xbf16>
    "tpu.trace_start"() <{level = 10 : i32, message = "bqd,bkd->bqk"}> : () -> ()
    %cst_40 = arith.constant dense<0.000000e+00> : vector<2x16x16xf32>
    %80 = tpu.matmul %77, %78, %cst_40 {dimension_numbers = #tpu.dot_dimension_numbers<[2], [2], [1], [1], [0, 0, 0, 1, 1, 1], [0], [0]>} : vector<2x16x32xbf16>, vector<2x16x32xbf16>, vector<2x16x16xf32> -> vector<2x16x16xf32>
    "tpu.trace_stop"() : () -> ()
    %cst_41 = arith.constant 0.176776692 : f32
    %81 = vector.broadcast %cst_41 : f32 to vector<2x16x16xf32>
    %82 = arith.mulf %80, %81 : vector<2x16x16xf32>
    %cst_42 = arith.constant dense<0xFF800000> : vector<2x16xf32>
    %83 = vector.multi_reduction <maximumf>, %82, %cst_42 [2] : vector<2x16x16xf32> to vector<2x16xf32>
    %84 = vector.shape_cast %83 : vector<2x16xf32> to vector<2x16x1xf32>
    %85 = vector.broadcast %84 : vector<2x16x1xf32> to vector<2x16x16xf32>
    %86 = arith.subf %82, %85 : vector<2x16x16xf32>
    %87 = math.exp %86 : vector<2x16x16xf32>
    %cst_43 = arith.constant dense<0.000000e+00> : vector<2x16xf32>
    %88 = vector.multi_reduction <add>, %87, %cst_43 [2] : vector<2x16x16xf32> to vector<2x16xf32>
    %89 = vector.shape_cast %88 : vector<2x16xf32> to vector<2x16x1xf32>
    %90 = tpu.reciprocal %89 {approx = true} : vector<2x16x1xf32> -> vector<2x16x1xf32>
    %91 = vector.broadcast %90 : vector<2x16x1xf32> to vector<2x16x16xf32>
    %92 = arith.mulf %87, %91 : vector<2x16x16xf32>
    %93 = arith.truncf %92 : vector<2x16x16xf32> to vector<2x16x16xbf16>
    "tpu.trace_start"() <{level = 10 : i32, message = "bqk,bkd->bqd"}> : () -> ()
    %cst_44 = arith.constant dense<0.000000e+00> : vector<2x16x32xf32>
    %94 = tpu.matmul %93, %79, %cst_44 {dimension_numbers = #tpu.dot_dimension_numbers<[2], [1], [1], [2], [0, 0, 0, 1, 1, 2], [0], [0]>} : vector<2x16x16xbf16>, vector<2x16x32xbf16>, vector<2x16x32xf32> -> vector<2x16x32xf32>
    "tpu.trace_stop"() : () -> ()
    %95 = vector.shape_cast %94 : vector<2x16x32xf32> to vector<32x32xf32>
    %96 = arith.truncf %95 : vector<32x32xf32> to vector<32x32xbf16>
    %c64 = arith.constant 64 : index
    %c0_45 = arith.constant 0 : index
    %97 = vector.load %arg10[%c64, %c0_45] : memref<128x128xbf16, #tpu.memory_space<vmem>>, vector<32x128xbf16>
    %cst_46 = arith.constant dense<0.000000e+00> : vector<32x128xf32>
    %98 = tpu.matmul %96, %97, %cst_46 {dimension_numbers = #tpu.dot_dimension_numbers<[1], [0], [0], [1], [0, 0, 1, 1], [], []>} : vector<32x32xbf16>, vector<32x128xbf16>, vector<32x128xf32> -> vector<32x128xf32>
    %99 = arith.addf %76, %98 : vector<32x128xf32>
    %100 = vector.extract_strided_slice %22 {offsets = [0, 0, 96], sizes = [2, 16, 32], strides = [1, 1, 1]} : vector<2x16x128xbf16> to vector<2x16x32xbf16>
    %101 = vector.extract_strided_slice %24 {offsets = [0, 0, 96], sizes = [2, 16, 32], strides = [1, 1, 1]} : vector<2x16x128xbf16> to vector<2x16x32xbf16>
    %102 = vector.extract_strided_slice %26 {offsets = [0, 0, 96], sizes = [2, 16, 32], strides = [1, 1, 1]} : vector<2x16x128xbf16> to vector<2x16x32xbf16>
    "tpu.trace_start"() <{level = 10 : i32, message = "bqd,bkd->bqk"}> : () -> ()
    %cst_47 = arith.constant dense<0.000000e+00> : vector<2x16x16xf32>
    %103 = tpu.matmul %100, %101, %cst_47 {dimension_numbers = #tpu.dot_dimension_numbers<[2], [2], [1], [1], [0, 0, 0, 1, 1, 1], [0], [0]>} : vector<2x16x32xbf16>, vector<2x16x32xbf16>, vector<2x16x16xf32> -> vector<2x16x16xf32>
    "tpu.trace_stop"() : () -> ()
    %cst_48 = arith.constant 0.176776692 : f32
    %104 = vector.broadcast %cst_48 : f32 to vector<2x16x16xf32>
    %105 = arith.mulf %103, %104 : vector<2x16x16xf32>
    %cst_49 = arith.constant dense<0xFF800000> : vector<2x16xf32>
    %106 = vector.multi_reduction <maximumf>, %105, %cst_49 [2] : vector<2x16x16xf32> to vector<2x16xf32>
    %107 = vector.shape_cast %106 : vector<2x16xf32> to vector<2x16x1xf32>
    %108 = vector.broadcast %107 : vector<2x16x1xf32> to vector<2x16x16xf32>
    %109 = arith.subf %105, %108 : vector<2x16x16xf32>
    %110 = math.exp %109 : vector<2x16x16xf32>
    %cst_50 = arith.constant dense<0.000000e+00> : vector<2x16xf32>
    %111 = vector.multi_reduction <add>, %110, %cst_50 [2] : vector<2x16x16xf32> to vector<2x16xf32>
    %112 = vector.shape_cast %111 : vector<2x16xf32> to vector<2x16x1xf32>
    %113 = tpu.reciprocal %112 {approx = true} : vector<2x16x1xf32> -> vector<2x16x1xf32>
    %114 = vector.broadcast %113 : vector<2x16x1xf32> to vector<2x16x16xf32>
    %115 = arith.mulf %110, %114 : vector<2x16x16xf32>
    %116 = arith.truncf %115 : vector<2x16x16xf32> to vector<2x16x16xbf16>
    "tpu.trace_start"() <{level = 10 : i32, message = "bqk,bkd->bqd"}> : () -> ()
    %cst_51 = arith.constant dense<0.000000e+00> : vector<2x16x32xf32>
    %117 = tpu.matmul %116, %102, %cst_51 {dimension_numbers = #tpu.dot_dimension_numbers<[2], [1], [1], [2], [0, 0, 0, 1, 1, 2], [0], [0]>} : vector<2x16x16xbf16>, vector<2x16x32xbf16>, vector<2x16x32xf32> -> vector<2x16x32xf32>
    "tpu.trace_stop"() : () -> ()
    %118 = vector.shape_cast %117 : vector<2x16x32xf32> to vector<32x32xf32>
    %119 = arith.truncf %118 : vector<32x32xf32> to vector<32x32xbf16>
    %c96 = arith.constant 96 : index
    %c0_52 = arith.constant 0 : index
    %120 = vector.load %arg10[%c96, %c0_52] : memref<128x128xbf16, #tpu.memory_space<vmem>>, vector<32x128xbf16>
    %cst_53 = arith.constant dense<0.000000e+00> : vector<32x128xf32>
    %121 = tpu.matmul %119, %120, %cst_53 {dimension_numbers = #tpu.dot_dimension_numbers<[1], [0], [0], [1], [0, 0, 1, 1], [], []>} : vector<32x32xbf16>, vector<32x128xbf16>, vector<32x128xf32> -> vector<32x128xf32>
    %122 = arith.addf %99, %121 : vector<32x128xf32>
    %123 = vector.shape_cast %122 : vector<32x128xf32> to vector<2x16x128xf32>
    %c0_54 = arith.constant 0 : index
    %c0_55 = arith.constant 0 : index
    %c0_56 = arith.constant 0 : index
    %124 = vector.load %arg12[%c0_54, %c0_55, %c0_56] : memref<2x16x128xf32, #tpu.memory_space<vmem>>, vector<2x16x128xf32>
    tpu.vector_store %arg12[%c0_54, %c0_55, %c0_56], %123 {strides = array<i32>} : memref<2x16x128xf32, #tpu.memory_space<vmem>>, vector<2x16x128xf32>,
    return
  }
  func.func @transform_0(%arg0: i32) -> (i32, i32, i32) {
    %c0_i32 = arith.constant 0 : i32
    %c0_i32_0 = arith.constant 0 : i32
    %c0_i32_1 = arith.constant 0 : i32
    return %arg0, %c0_i32, %c0_i32_0 : i32, i32, i32
  }
  func.func @transform_1(%arg0: i32) -> (i32, i32, i32) {
    %c0_i32 = arith.constant 0 : i32
    %c0_i32_0 = arith.constant 0 : i32
    %c0_i32_1 = arith.constant 0 : i32
    return %arg0, %c0_i32, %c0_i32_0 : i32, i32, i32
  }
  func.func @transform_2(%arg0: i32) -> (i32, i32, i32) {
    %c0_i32 = arith.constant 0 : i32
    %c0_i32_0 = arith.constant 0 : i32
    %c0_i32_1 = arith.constant 0 : i32
    return %arg0, %c0_i32, %c0_i32_0 : i32, i32, i32
  }
  func.func @transform_3(%arg0: i32) -> (i32, i32) {
    %c0_i32 = arith.constant 0 : i32
    %c0_i32_0 = arith.constant 0 : i32
    %c0_i32_1 = arith.constant 0 : i32
    return %c0_i32, %c0_i32_0 : i32, i32
  }
  func.func @transform_4(%arg0: i32) -> (i32, i32) {
    %c0_i32 = arith.constant 0 : i32
    %c0_i32_0 = arith.constant 0 : i32
    %c0_i32_1 = arith.constant 0 : i32
    return %c0_i32, %c0_i32_0 : i32, i32
  }
  func.func @transform_5(%arg0: i32) -> (i32, i32) {
    %c0_i32 = arith.constant 0 : i32
    %c0_i32_0 = arith.constant 0 : i32
    %c0_i32_1 = arith.constant 0 : i32
    return %c0_i32, %c0_i32_0 : i32, i32
  }
  func.func @transform_6(%arg0: i32) -> (i32, i32) {
    %c0_i32 = arith.constant 0 : i32
    %c0_i32_0 = arith.constant 0 : i32
    %c0_i32_1 = arith.constant 0 : i32
    return %c0_i32, %c0_i32_0 : i32, i32
  }
  func.func @transform_7(%arg0: i32) -> (i32, i32) {
    %c0_i32 = arith.constant 0 : i32
    %c0_i32_0 = arith.constant 0 : i32
    %c0_i32_1 = arith.constant 0 : i32
    return %c0_i32, %c0_i32_0 : i32, i32
  }
  func.func @transform_8(%arg0: i32) -> (i32, i32) {
    %c0_i32 = arith.constant 0 : i32
    %c0_i32_0 = arith.constant 0 : i32
    %c0_i32_1 = arith.constant 0 : i32
    return %c0_i32, %c0_i32_0 : i32, i32
  }
  func.func @transform_9(%arg0: i32) -> (i32, i32) {
    %c0_i32 = arith.constant 0 : i32
    %c0_i32_0 = arith.constant 0 : i32
    %c0_i32_1 = arith.constant 0 : i32
    return %c0_i32, %c0_i32_0 : i32, i32
  }
  func.func @transform_10(%arg0: i32) -> (i32, i32) {
    %c0_i32 = arith.constant 0 : i32
    %c0_i32_0 = arith.constant 0 : i32
    %c0_i32_1 = arith.constant 0 : i32
    return %c0_i32, %c0_i32_0 : i32, i32
  }
  func.func @transform_11(%arg0: i32) -> (i32, i32, i32) {
    %c0_i32 = arith.constant 0 : i32
    %c0_i32_0 = arith.constant 0 : i32
    %c0_i32_1 = arith.constant 0 : i32
    return %arg0, %c0_i32, %c0_i32_0 : i32, i32, i32
  }
}

</mosaic_0001>

<llo_original>
// kernel: tpu_custom_call.1
$region0: #{tpu_custom_call.1}
  #allocation0 [shape = 'u32[]', space=smem, size = 0x4, offset = 0x4, fixed_abs, tag = 'smem constant byte address 0x4 - core index']
  #allocation1 [shape = 'u32[72,128]{1,0:T(1,128)}', space=vmem, size = 0x9000, scoped, tag = 'internal scratch']
  %s0 = inlined_call_operand.hbm [shape: bf16[4,16,128], index: 0, kind: input, shape index: {}]
  %s1 = inlined_call_operand.hbm [shape: bf16[4,16,128], index: 1, kind: input, shape index: {}]
  %s2 = inlined_call_operand.hbm [shape: bf16[4,16,128], index: 2, kind: input, shape index: {}]
  %s3 = inlined_call_operand.hbm [shape: bf16[128,128], index: 3, kind: input, shape index: {}]
  %s4 = inlined_call_operand.vmem [shape: f32[1,128], index: 4, kind: input, shape index: {}]
  %s5 = inlined_call_operand.hbm [shape: bf16[128,128], index: 5, kind: input, shape index: {}]
  %s6 = inlined_call_operand.vmem [shape: f32[1,128], index: 6, kind: input, shape index: {}]
  %s7 = inlined_call_operand.hbm [shape: bf16[128,128], index: 7, kind: input, shape index: {}]
  %s8 = inlined_call_operand.vmem [shape: f32[1,128], index: 8, kind: input, shape index: {}]
  %s9 = inlined_call_operand.hbm [shape: bf16[128,128], index: 9, kind: input, shape index: {}]
  %s10 = inlined_call_operand.vmem [shape: f32[1,128], index: 10, kind: input, shape index: {}]
  %s11 = inlined_call_operand.hbm [shape: f32[4,16,128], index: 11, kind: output, shape index: {}]
  %s12 = sld [smem:[#allocation0]]
  $region105: #{tpu_custom_call.1} parent=0
    _
  %s14 = ssub.s32 1, %s12
  %s15 = scalar_select 0, %s14, %s12
  $region1: #{tpu_custom_call.1} parent=0
    #allocation2 [shape = 'u8[16384]{0}', space=vmem, size = 0x4000, scoped, tag = 'input window, operand 0']
    #allocation3 [shape = 's32[2]{0}', space=sflag, size = 0x8, scoped, tag = 'scoped memory for tpu_custom_call.1']
    #allocation4 [shape = 's32[2]{0}', space=sflag, size = 0x8, scoped, tag = 'scoped memory for tpu_custom_call.1']
    #allocation5 [shape = 'u8[16384]{0}', space=vmem, size = 0x4000, scoped, tag = 'input window, operand 1']
    #allocation6 [shape = 's32[2]{0}', space=sflag, size = 0x8, scoped, tag = 'scoped memory for tpu_custom_call.1']
    #allocation7 [shape = 'u8[16384]{0}', space=vmem, size = 0x4000, scoped, tag = 'input window, operand 2']
    #allocation8 [shape = 'u8[32768]{0}', space=vmem, size = 0x8000, scoped, tag = 'input window, operand 3, single buffered']
    #allocation9 [shape = 's32[1]{0}', space=sflag, size = 0x4, scoped, tag = 'scoped memory for tpu_custom_call.1']
    #allocation10 [shape = 'u8[32768]{0}', space=vmem, size = 0x8000, scoped, tag = 'input window, operand 5, single buffered']
    #allocation11 [shape = 'u8[32768]{0}', space=vmem, size = 0x8000, scoped, tag = 'input window, operand 7, single buffered']
    #allocation12 [shape = 's32[1]{0}', space=sflag, size = 0x4, scoped, tag = 'scoped memory for tpu_custom_call.1']
    #allocation13 [shape = 'u8[32768]{0}', space=vmem, size = 0x8000, scoped, tag = 'input window, operand 9, single buffered']
    #allocation14 [shape = 'u8[32768]{0}', space=vmem, size = 0x8000, scoped, tag = 'output window, operand 0']
    %16 = vsyncpa [#allocation3], 0
    %s17 = scalar_lea.sflag [#allocation3], 1
    %18 = vsyncpa %s17, 0
    %19 = vsyncpa [#allocation6], 0
    %s20 = scalar_lea.sflag [#allocation6], 1
    %21 = vsyncpa %s20, 0
    %22 = vsyncpa [#allocation9], 0
    %23 = vsyncpa [#allocation12], 0
    %24 = vsyncpa [#allocation4], 0
    %s25 = scalar_lea.sflag [#allocation4], 1
    %26 = vsyncpa %s25, 0
    loop: start=0, step=1, limit=4
    $region2: #{tpu_custom_call.1} parent=1 // loop_pre_header
      _
    $region3: #{tpu_custom_call.1} parent=1 // loop_header
      %s28 = sphi 0, %s32
      %p29 = scmp.ge.s32.totalorder %s28, 4
      %s38 = sphi 0, %s40
      %s41 = sphi 0, %s38
      %s42 = sphi 0, %s41
      %s58 = sphi 0, %s42
      %s64 = sphi 0, %s66
      %s67 = sphi 0, %s64
      %s68 = sphi 0, %s67
      %s84 = sphi 0, %s68
      %s90 = sphi 0, %s92
      %s93 = sphi 0, %s90
      %s94 = sphi 0, %s93
      %s110 = sphi 0, %s94
      %s114 = sphi 0, %s114
      %s116 = sphi 0, %s114
      %s117 = sphi 0, %s116
      %s131 = sphi 0, %s117
      %s135 = sphi 0, %s135
      %s137 = sphi 0, %s135
      %s138 = sphi 0, %s137
      %s152 = sphi 0, %s138
      %s156 = sphi 0, %s156
      %s158 = sphi 0, %s156
      %s159 = sphi 0, %s158
      %s173 = sphi 0, %s159
      %s177 = sphi 0, %s177
      %s179 = sphi 0, %s177
      %s180 = sphi 0, %s179
      %s194 = sphi 0, %s180
      %s198 = sphi 0, %s198
      %s200 = sphi 0, %s198
      %s201 = sphi 0, %s200
      %s215 = sphi 0, %s201
      %s219 = sphi 0, %s219
      %s221 = sphi 0, %s219
      %s222 = sphi 0, %s221
      %s236 = sphi 0, %s222
      %s240 = sphi 0, %s240
      %s242 = sphi 0, %s240
      %s243 = sphi 0, %s242
      %s257 = sphi 0, %s243
      %s261 = sphi 0, %s261
      %s263 = sphi 0, %s261
      %s264 = sphi 0, %s263
      %s278 = sphi 0, %s264
      %s284 = sphi 0, %s286
      %s287 = sphi 0, %s284
      %s288 = sphi 0, %s287
      %s304 = sphi 0, %s288
    $region4: #{tpu_custom_call.1} parent=1 // loop_header_branch
      %31 = sbr.rel (%p29) target = $region8
    $region5: #{tpu_custom_call.1} parent=1 // loop_body
      %s33 = ssub.s32 %s28, 1
      %s34 = ssub.s32 %s28, 2
      %s35 = sadd.s32 %s28, 1
      %s36 = ssub.s32 %s28, %s35
      %p37 = scmp.eq.s32.totalorder %s36, 0
      %s39 = sadd.s32 %s38, 1
      %s40 = scalar_select %p37, %s38, %s39
      %p43 = pneg %p37
      %p44 = scmp.eq.s32.totalorder %s28, 1
      %p45 = por %p43, %p44
      %p46 = scmp.ne.s32.totalorder %s38, %s41
      %p47 = scmp.eq.s32.totalorder %s28, 0
      %p48 = por %p46, %p47
      %p49 = scmp.ne.s32.totalorder %s38, %s41
      %p50 = scmp.eq.s32.totalorder %s33, 1
      %p51 = por %p49, %p50
      %p52 = scmp.ne.s32.totalorder %s41, %s42
      %p53 = scmp.eq.s32.totalorder %s33, 0
      %p54 = por %p52, %p53
      %p55 = scmp.ne.s32.totalorder %s41, %s42
      %p56 = scmp.eq.s32.totalorder %s34, 1
      %p57 = por %p55, %p56
      %p59 = scmp.ne.s32.totalorder %s42, %s58
      %p60 = scmp.eq.s32.totalorder %s34, 0
      %p61 = por %p59, %p60
      %s62 = ssub.s32 %s28, %s35
      %p63 = scmp.eq.s32.totalorder %s62, 0
      %s65 = sadd.s32 %s64, 1
      %s66 = scalar_select %p63, %s64, %s65
      %p69 = pneg %p63
      %p70 = scmp.eq.s32.totalorder %s28, 1
      %p71 = por %p69, %p70
      %p72 = scmp.ne.s32.totalorder %s64, %s67
      %p73 = scmp.eq.s32.totalorder %s28, 0
      %p74 = por %p72, %p73
      %p75 = scmp.ne.s32.totalorder %s64, %s67
      %p76 = scmp.eq.s32.totalorder %s33, 1
      %p77 = por %p75, %p76
      %p78 = scmp.ne.s32.totalorder %s67, %s68
      %p79 = scmp.eq.s32.totalorder %s33, 0
      %p80 = por %p78, %p79
      %p81 = scmp.ne.s32.totalorder %s67, %s68
      %p82 = scmp.eq.s32.totalorder %s34, 1
      %p83 = por %p81, %p82
      %p85 = scmp.ne.s32.totalorder %s68, %s84
      %p86 = scmp.eq.s32.totalorder %s34, 0
      %p87 = por %p85, %p86
      %s88 = ssub.s32 %s28, %s35
      %p89 = scmp.eq.s32.totalorder %s88, 0
      %s91 = sadd.s32 %s90, 1
      %s92 = scalar_select %p89, %s90, %s91
      %p95 = pneg %p89
      %p96 = scmp.eq.s32.totalorder %s28, 1
      %p97 = por %p95, %p96
      %p98 = scmp.ne.s32.totalorder %s90, %s93
      %p99 = scmp.eq.s32.totalorder %s28, 0
      %p100 = por %p98, %p99
      %p101 = scmp.ne.s32.totalorder %s90, %s93
      %p102 = scmp.eq.s32.totalorder %s33, 1
      %p103 = por %p101, %p102
      %p104 = scmp.ne.s32.totalorder %s93, %s94
      %p105 = scmp.eq.s32.totalorder %s33, 0
      %p106 = por %p104, %p105
      %p107 = scmp.ne.s32.totalorder %s93, %s94
      %p108 = scmp.eq.s32.totalorder %s34, 1
      %p109 = por %p107, %p108
      %p111 = scmp.ne.s32.totalorder %s94, %s110
      %p112 = scmp.eq.s32.totalorder %s34, 0
      %p113 = por %p111, %p112
      %s115 = sadd.s32 %s114, 1
      %p118 = scmp.eq.s32.totalorder %s28, 1
      %p119 = scmp.ne.s32.totalorder %s114, %s116
      %p120 = scmp.eq.s32.totalorder %s28, 0
      %p121 = por %p119, %p120
      %p122 = scmp.ne.s32.totalorder %s114, %s116
      %p123 = scmp.eq.s32.totalorder %s33, 1
      %p124 = por %p122, %p123
      %p125 = scmp.ne.s32.totalorder %s116, %s117
      %p126 = scmp.eq.s32.totalorder %s33, 0
      %p127 = por %p125, %p126
      %p128 = scmp.ne.s32.totalorder %s116, %s117
      %p129 = scmp.eq.s32.totalorder %s34, 1
      %p130 = por %p128, %p129
      %p132 = scmp.ne.s32.totalorder %s117, %s131
      %p133 = scmp.eq.s32.totalorder %s34, 0
      %p134 = por %p132, %p133
      %s136 = sadd.s32 %s135, 1
      %p139 = scmp.eq.s32.totalorder %s28, 1
      %p140 = scmp.ne.s32.totalorder %s135, %s137
      %p141 = scmp.eq.s32.totalorder %s28, 0
      %p142 = por %p140, %p141
      %p143 = scmp.ne.s32.totalorder %s135, %s137
      %p144 = scmp.eq.s32.totalorder %s33, 1
      %p145 = por %p143, %p144
      %p146 = scmp.ne.s32.totalorder %s137, %s138
      %p147 = scmp.eq.s32.totalorder %s33, 0
      %p148 = por %p146, %p147
      %p149 = scmp.ne.s32.totalorder %s137, %s138
      %p150 = scmp.eq.s32.totalorder %s34, 1
      %p151 = por %p149, %p150
      %p153 = scmp.ne.s32.totalorder %s138, %s152
      %p154 = scmp.eq.s32.totalorder %s34, 0
      %p155 = por %p153, %p154
      %s157 = sadd.s32 %s156, 1
      %p160 = scmp.eq.s32.totalorder %s28, 1
      %p161 = scmp.ne.s32.totalorder %s156, %s158
      %p162 = scmp.eq.s32.totalorder %s28, 0
      %p163 = por %p161, %p162
      %p164 = scmp.ne.s32.totalorder %s156, %s158
      %p165 = scmp.eq.s32.totalorder %s33, 1
      %p166 = por %p164, %p165
      %p167 = scmp.ne.s32.totalorder %s158, %s159
      %p168 = scmp.eq.s32.totalorder %s33, 0
      %p169 = por %p167, %p168
      %p170 = scmp.ne.s32.totalorder %s158, %s159
      %p171 = scmp.eq.s32.totalorder %s34, 1
      %p172 = por %p170, %p171
      %p174 = scmp.ne.s32.totalorder %s159, %s173
      %p175 = scmp.eq.s32.totalorder %s34, 0
      %p176 = por %p174, %p175
      %s178 = sadd.s32 %s177, 1
      %p181 = scmp.eq.s32.totalorder %s28, 1
      %p182 = scmp.ne.s32.totalorder %s177, %s179
      %p183 = scmp.eq.s32.totalorder %s28, 0
      %p184 = por %p182, %p183
      %p185 = scmp.ne.s32.totalorder %s177, %s179
      %p186 = scmp.eq.s32.totalorder %s33, 1
      %p187 = por %p185, %p186
      %p188 = scmp.ne.s32.totalorder %s179, %s180
      %p189 = scmp.eq.s32.totalorder %s33, 0
      %p190 = por %p188, %p189
      %p191 = scmp.ne.s32.totalorder %s179, %s180
      %p192 = scmp.eq.s32.totalorder %s34, 1
      %p193 = por %p191, %p192
      %p195 = scmp.ne.s32.totalorder %s180, %s194
      %p196 = scmp.eq.s32.totalorder %s34, 0
      %p197 = por %p195, %p196
      %s199 = sadd.s32 %s198, 1
      %p202 = scmp.eq.s32.totalorder %s28, 1
      %p203 = scmp.ne.s32.totalorder %s198, %s200
      %p204 = scmp.eq.s32.totalorder %s28, 0
      %p205 = por %p203, %p204
      %p206 = scmp.ne.s32.totalorder %s198, %s200
      %p207 = scmp.eq.s32.totalorder %s33, 1
      %p208 = por %p206, %p207
      %p209 = scmp.ne.s32.totalorder %s200, %s201
      %p210 = scmp.eq.s32.totalorder %s33, 0
      %p211 = por %p209, %p210
      %p212 = scmp.ne.s32.totalorder %s200, %s201
      %p213 = scmp.eq.s32.totalorder %s34, 1
      %p214 = por %p212, %p213
      %p216 = scmp.ne.s32.totalorder %s201, %s215
      %p217 = scmp.eq.s32.totalorder %s34, 0
      %p218 = por %p216, %p217
      %s220 = sadd.s32 %s219, 1
      %p223 = scmp.eq.s32.totalorder %s28, 1
      %p224 = scmp.ne.s32.totalorder %s219, %s221
      %p225 = scmp.eq.s32.totalorder %s28, 0
      %p226 = por %p224, %p225
      %p227 = scmp.ne.s32.totalorder %s219, %s221
      %p228 = scmp.eq.s32.totalorder %s33, 1
      %p229 = por %p227, %p228
      %p230 = scmp.ne.s32.totalorder %s221, %s222
      %p231 = scmp.eq.s32.totalorder %s33, 0
      %p232 = por %p230, %p231
      %p233 = scmp.ne.s32.totalorder %s221, %s222
      %p234 = scmp.eq.s32.totalorder %s34, 1
      %p235 = por %p233, %p234
      %p237 = scmp.ne.s32.totalorder %s222, %s236
      %p238 = scmp.eq.s32.totalorder %s34, 0
      %p239 = por %p237, %p238
      %s241 = sadd.s32 %s240, 1
      %p244 = scmp.eq.s32.totalorder %s28, 1
      %p245 = scmp.ne.s32.totalorder %s240, %s242
      %p246 = scmp.eq.s32.totalorder %s28, 0
      %p247 = por %p245, %p246
      %p248 = scmp.ne.s32.totalorder %s240, %s242
      %p249 = scmp.eq.s32.totalorder %s33, 1
      %p250 = por %p248, %p249
      %p251 = scmp.ne.s32.totalorder %s242, %s243
      %p252 = scmp.eq.s32.totalorder %s33, 0
      %p253 = por %p251, %p252
      %p254 = scmp.ne.s32.totalorder %s242, %s243
      %p255 = scmp.eq.s32.totalorder %s34, 1
      %p256 = por %p254, %p255
      %p258 = scmp.ne.s32.totalorder %s243, %s257
      %p259 = scmp.eq.s32.totalorder %s34, 0
      %p260 = por %p258, %p259
      %s262 = sadd.s32 %s261, 1
      %p265 = scmp.eq.s32.totalorder %s28, 1
      %p266 = scmp.ne.s32.totalorder %s261, %s263
      %p267 = scmp.eq.s32.totalorder %s28, 0
      %p268 = por %p266, %p267
      %p269 = scmp.ne.s32.totalorder %s261, %s263
      %p270 = scmp.eq.s32.totalorder %s33, 1
      %p271 = por %p269, %p270
      %p272 = scmp.ne.s32.totalorder %s263, %s264
      %p273 = scmp.eq.s32.totalorder %s33, 0
      %p274 = por %p272, %p273
      %p275 = scmp.ne.s32.totalorder %s263, %s264
      %p276 = scmp.eq.s32.totalorder %s34, 1
      %p277 = por %p275, %p276
      %p279 = scmp.ne.s32.totalorder %s264, %s278
      %p280 = scmp.eq.s32.totalorder %s34, 0
      %p281 = por %p279, %p280
      %s282 = ssub.s32 %s28, %s35
      %p283 = scmp.eq.s32.totalorder %s282, 0
      %s285 = sadd.s32 %s284, 1
      %s286 = scalar_select %p283, %s284, %s285
      %p289 = pneg %p283
      %p290 = scmp.eq.s32.totalorder %s28, 1
      %p291 = por %p289, %p290
      %p292 = scmp.ne.s32.totalorder %s284, %s287
      %p293 = scmp.eq.s32.totalorder %s28, 0
      %p294 = por %p292, %p293
      %p295 = scmp.ne.s32.totalorder %s284, %s287
      %p296 = scmp.eq.s32.totalorder %s33, 1
      %p297 = por %p295, %p296
      %p298 = scmp.ne.s32.totalorder %s287, %s288
      %p299 = scmp.eq.s32.totalorder %s33, 0
      %p300 = por %p298, %p299
      %p301 = scmp.ne.s32.totalorder %s287, %s288
      %p302 = scmp.eq.s32.totalorder %s34, 1
      %p303 = por %p301, %p302
      %p305 = scmp.ne.s32.totalorder %s288, %s304
      %p306 = scmp.eq.s32.totalorder %s34, 0
      %p307 = por %p305, %p306
      %p308 = scmp.le.s32.totalorder 1, %s28
      %p309 = scmp.lt.s32.totalorder %s28, 3
      %p310 = pnand %p308, %p309
      %p311 = pneg %p310
      // Predicated region
      $region9: #{tpu_custom_call.1} parent=5 // pred_check
        _
      $region10: #{tpu_custom_call.1} parent=5 // pred_check_branch
        %313 = sbr.rel (%p310) target = $region12
      $region11: #{tpu_custom_call.1} parent=5 // pred_region
        %s314 = ssub.s32 %s28, 1
        // Predicated region
        $region13: #{tpu_custom_call.1} parent=11 // pred_check
          %p315 = pneg %p127
        $region14: #{tpu_custom_call.1} parent=11 // pred_check_branch
          %317 = sbr.rel (%p315) target = $region16
        $region15: #{tpu_custom_call.1} parent=11 // pred_region
          %319 = vsyncadd [#allocation9], 0
          %s320 = sshll.u32 %s3, 4
          %s321 = int_to_ptr.hbm [resolvable:$true] %s320
          %s322 = sshll.u32 [#allocation8], 4
          %s323 = int_to_ptr.vmem [resolvable:$true] %s322
          %328 = dma.hbm_to_vmem [thread:$0]  %s321, 1024, %s323, [#allocation9], 64, 64, 4
        $region16: #{tpu_custom_call.1} parent=11 // pred_fallthru
          _
        // Predicated region
        $region17: #{tpu_custom_call.1} parent=11 // pred_check
          %p329 = pneg %p148
        $region18: #{tpu_custom_call.1} parent=11 // pred_check_branch
          %331 = sbr.rel (%p329) target = $region20
        $region19: #{tpu_custom_call.1} parent=11 // pred_region
          _
        $region20: #{tpu_custom_call.1} parent=11 // pred_fallthru
          _
        // Predicated region
        $region21: #{tpu_custom_call.1} parent=11 // pred_check
          %p332 = pneg %p169
        $region22: #{tpu_custom_call.1} parent=11 // pred_check_branch
          %334 = sbr.rel (%p332) target = $region24
        $region23: #{tpu_custom_call.1} parent=11 // pred_region
          %336 = vsyncadd [#allocation9], 0
          %s337 = sshll.u32 %s5, 4
          %s338 = int_to_ptr.hbm [resolvable:$true] %s337
          %s339 = sshll.u32 [#allocation10], 4
          %s340 = int_to_ptr.vmem [resolvable:$true] %s339
          %345 = dma.hbm_to_vmem [thread:$0]  %s338, 1024, %s340, [#allocation9], 64, 64, 4
        $region24: #{tpu_custom_call.1} parent=11 // pred_fallthru
          _
        // Predicated region
        $region25: #{tpu_custom_call.1} parent=11 // pred_check
          %p346 = pneg %p190
        $region26: #{tpu_custom_call.1} parent=11 // pred_check_branch
          %348 = sbr.rel (%p346) target = $region28
        $region27: #{tpu_custom_call.1} parent=11 // pred_region
          _
        $region28: #{tpu_custom_call.1} parent=11 // pred_fallthru
          _
        // Predicated region
        $region29: #{tpu_custom_call.1} parent=11 // pred_check
          %p349 = pneg %p211
        $region30: #{tpu_custom_call.1} parent=11 // pred_check_branch
          %351 = sbr.rel (%p349) target = $region32
        $region31: #{tpu_custom_call.1} parent=11 // pred_region
          %353 = vsyncadd [#allocation12], 0
          %s354 = sshll.u32 %s7, 4
          %s355 = int_to_ptr.hbm [resolvable:$true] %s354
          %s356 = sshll.u32 [#allocation11], 4
          %s357 = int_to_ptr.vmem [resolvable:$true] %s356
          %362 = dma.hbm_to_vmem [thread:$0]  %s355, 1024, %s357, [#allocation12], 64, 64, 4
        $region32: #{tpu_custom_call.1} parent=11 // pred_fallthru
          _
        // Predicated region
        $region33: #{tpu_custom_call.1} parent=11 // pred_check
          %p363 = pneg %p232
        $region34: #{tpu_custom_call.1} parent=11 // pred_check_branch
          %365 = sbr.rel (%p363) target = $region36
        $region35: #{tpu_custom_call.1} parent=11 // pred_region
          _
        $region36: #{tpu_custom_call.1} parent=11 // pred_fallthru
          _
        // Predicated region
        $region37: #{tpu_custom_call.1} parent=11 // pred_check
          %p366 = pneg %p253
        $region38: #{tpu_custom_call.1} parent=11 // pred_check_branch
          %368 = sbr.rel (%p366) target = $region40
        $region39: #{tpu_custom_call.1} parent=11 // pred_region
          %370 = vsyncadd [#allocation12], 0
          %s371 = sshll.u32 %s9, 4
          %s372 = int_to_ptr.hbm [resolvable:$true] %s371
          %s373 = sshll.u32 [#allocation13], 4
          %s374 = int_to_ptr.vmem [resolvable:$true] %s373
          %379 = dma.hbm_to_vmem [thread:$0]  %s372, 1024, %s374, [#allocation12], 64, 64, 4
        $region40: #{tpu_custom_call.1} parent=11 // pred_fallthru
          _
        // Predicated region
        $region41: #{tpu_custom_call.1} parent=11 // pred_check
          %p380 = pneg %p274
        $region42: #{tpu_custom_call.1} parent=11 // pred_check_branch
          %382 = sbr.rel (%p380) target = $region44
        $region43: #{tpu_custom_call.1} parent=11 // pred_region
          _
        $region44: #{tpu_custom_call.1} parent=11 // pred_fallthru
          _
      $region12: #{tpu_custom_call.1} parent=5 // pred_fallthru
        _
      %p383 = scmp.lt.s32.totalorder %s28, 2
      // Predicated region
      $region45: #{tpu_custom_call.1} parent=5 // pred_check
        %p384 = pneg %p383
      $region46: #{tpu_custom_call.1} parent=5 // pred_check_branch
        %386 = sbr.rel (%p384) target = $region48
      $region47: #{tpu_custom_call.1} parent=5 // pred_region
        // Predicated region
        $region49: #{tpu_custom_call.1} parent=47 // pred_check
          %p387 = pneg %p48
        $region50: #{tpu_custom_call.1} parent=47 // pred_check_branch
          %389 = sbr.rel (%p387) target = $region52
        $region51: #{tpu_custom_call.1} parent=47 // pred_region
          %s390 = sand.u32 %s38, 1
          %s391 = scalar_lea.sflag [#allocation3], %s390
          %s392 = sand.u32 %s38, 1
          %s393 = smul.addr %s392, 16
          %s394 = scalar_lea.vmem [#allocation2], %s393
          %s395 = smul.u32 2, %s28
          %397 = vsyncadd %s391, 0
          %s398 = smul.addr %s395, 2
          %s399 = smul.addr %s398, 4
          %s400 = scalar_lea.hbm %s0, %s399
          %s401 = sshll.u32 %s400, 4
          %s402 = int_to_ptr.hbm [resolvable:$true] %s401
          %s403 = sshll.u32 %s394, 4
          %s404 = int_to_ptr.vmem [resolvable:$true] %s403
          %409 = dma.hbm_to_vmem [thread:$0]  %s402, 256, %s404, %s391, 64, 64, 4
        $region52: #{tpu_custom_call.1} parent=47 // pred_fallthru
          _
        // Predicated region
        $region53: #{tpu_custom_call.1} parent=47 // pred_check
          %p410 = pneg %p74
        $region54: #{tpu_custom_call.1} parent=47 // pred_check_branch
          %412 = sbr.rel (%p410) target = $region56
        $region55: #{tpu_custom_call.1} parent=47 // pred_region
          %s413 = sand.u32 %s28, 1
          %s414 = scalar_lea.sflag [#allocation6], %s413
          %s415 = sand.u32 %s64, 1
          %s416 = smul.addr %s415, 16
          %s417 = scalar_lea.vmem [#allocation5], %s416
          %s418 = smul.u32 2, %s28
          %420 = vsyncadd %s414, 0
          %s421 = smul.addr %s418, 2
          %s422 = smul.addr %s421, 4
          %s423 = scalar_lea.hbm %s1, %s422
          %s424 = sshll.u32 %s423, 4
          %s425 = int_to_ptr.hbm [resolvable:$true] %s424
          %s426 = sshll.u32 %s417, 4
          %s427 = int_to_ptr.vmem [resolvable:$true] %s426
          %432 = dma.hbm_to_vmem [thread:$0]  %s425, 256, %s427, %s414, 64, 64, 4
        $region56: #{tpu_custom_call.1} parent=47 // pred_fallthru
          _
        // Predicated region
        $region57: #{tpu_custom_call.1} parent=47 // pred_check
          %p433 = pneg %p100
        $region58: #{tpu_custom_call.1} parent=47 // pred_check_branch
          %435 = sbr.rel (%p433) target = $region60
        $region59: #{tpu_custom_call.1} parent=47 // pred_region
          %s436 = sand.u32 %s28, 1
          %s437 = scalar_lea.sflag [#allocation6], %s436
          %s438 = sand.u32 %s90, 1
          %s439 = smul.addr %s438, 16
          %s440 = scalar_lea.vmem [#allocation7], %s439
          %s441 = smul.u32 2, %s28
          %443 = vsyncadd %s437, 0
          %s444 = smul.addr %s441, 2
          %s445 = smul.addr %s444, 4
          %s446 = scalar_lea.hbm %s2, %s445
          %s447 = sshll.u32 %s446, 4
          %s448 = int_to_ptr.hbm [resolvable:$true] %s447
          %s449 = sshll.u32 %s440, 4
          %s450 = int_to_ptr.vmem [resolvable:$true] %s449
          %455 = dma.hbm_to_vmem [thread:$0]  %s448, 256, %s450, %s437, 64, 64, 4
        $region60: #{tpu_custom_call.1} parent=47 // pred_fallthru
          _
      $region48: #{tpu_custom_call.1} parent=5 // pred_fallthru
        _
      %p456 = scmp.le.s32.totalorder 1, %s28
      %p457 = scmp.lt.s32.totalorder %s28, 3
      %p458 = pnand %p456, %p457
      %p459 = pneg %p458
      // Predicated region
      $region61: #{tpu_custom_call.1} parent=5 // pred_check
        _
      $region62: #{tpu_custom_call.1} parent=5 // pred_check_branch
        %461 = sbr.rel (%p458) target = $region64
      $region63: #{tpu_custom_call.1} parent=5 // pred_region
        %s462 = ssub.s32 %s28, 1
        %s463 = sand.u32 %s41, 1
        %s464 = scalar_lea.sflag [#allocation3], %s463
        %s465 = sand.u32 %s41, 1
        %s466 = smul.addr %s465, 16
        %s467 = scalar_lea.vmem [#allocation2], %s466
        // Predicated region
        $region65: #{tpu_custom_call.1} parent=63 // pred_check
          %p468 = pneg %p54
        $region66: #{tpu_custom_call.1} parent=63 // pred_check_branch
          %470 = sbr.rel (%p468) target = $region68
        $region67: #{tpu_custom_call.1} parent=63 // pred_region
          %472 = dma.done %s464, 256
        $region68: #{tpu_custom_call.1} parent=63 // pred_fallthru
          _
        %s473 = sand.u32 %s33, 1
        %s474 = scalar_lea.sflag [#allocation6], %s473
        %s475 = sand.u32 %s67, 1
        %s476 = smul.addr %s475, 16
        %s477 = scalar_lea.vmem [#allocation5], %s476
        // Predicated region
        $region69: #{tpu_custom_call.1} parent=63 // pred_check
          %p478 = pneg %p80
        $region70: #{tpu_custom_call.1} parent=63 // pred_check_branch
          %480 = sbr.rel (%p478) target = $region72
        $region71: #{tpu_custom_call.1} parent=63 // pred_region
          %482 = dma.done %s474, 256
        $region72: #{tpu_custom_call.1} parent=63 // pred_fallthru
          _
        %s483 = sand.u32 %s33, 1
        %s484 = scalar_lea.sflag [#allocation6], %s483
        %s485 = sand.u32 %s93, 1
        %s486 = smul.addr %s485, 16
        %s487 = scalar_lea.vmem [#allocation7], %s486
        // Predicated region
        $region73: #{tpu_custom_call.1} parent=63 // pred_check
          %p488 = pneg %p106
        $region74: #{tpu_custom_call.1} parent=63 // pred_check_branch
          %490 = sbr.rel (%p488) target = $region76
        $region75: #{tpu_custom_call.1} parent=63 // pred_region
          %492 = dma.done %s484, 256
        $region76: #{tpu_custom_call.1} parent=63 // pred_fallthru
          _
        // Predicated region
        $region77: #{tpu_custom_call.1} parent=63 // pred_check
          %p493 = pneg %p127
        $region78: #{tpu_custom_call.1} parent=63 // pred_check_branch
          %495 = sbr.rel (%p493) target = $region80
        $region79: #{tpu_custom_call.1} parent=63 // pred_region
          %497 = dma.done [#allocation9], 1024
        $region80: #{tpu_custom_call.1} parent=63 // pred_fallthru
          _
        // Predicated region
        $region81: #{tpu_custom_call.1} parent=63 // pred_check
          %p498 = pneg %p169
        $region82: #{tpu_custom_call.1} parent=63 // pred_check_branch
          %500 = sbr.rel (%p498) target = $region84
        $region83: #{tpu_custom_call.1} parent=63 // pred_region
          %502 = dma.done [#allocation9], 1024
        $region84: #{tpu_custom_call.1} parent=63 // pred_fallthru
          _
        // Predicated region
        $region85: #{tpu_custom_call.1} parent=63 // pred_check
          %p503 = pneg %p211
        $region86: #{tpu_custom_call.1} parent=63 // pred_check_branch
          %505 = sbr.rel (%p503) target = $region88
        $region87: #{tpu_custom_call.1} parent=63 // pred_region
          %507 = dma.done [#allocation12], 1024
        $region88: #{tpu_custom_call.1} parent=63 // pred_fallthru
          _
        // Predicated region
        $region89: #{tpu_custom_call.1} parent=63 // pred_check
          %p508 = pneg %p253
        $region90: #{tpu_custom_call.1} parent=63 // pred_check_branch
          %510 = sbr.rel (%p508) target = $region92
        $region91: #{tpu_custom_call.1} parent=63 // pred_region
          %512 = dma.done [#allocation12], 1024
        $region92: #{tpu_custom_call.1} parent=63 // pred_fallthru
          _
        %s513 = sand.u32 %s41, 1
        %s514 = scalar_lea.sflag [#allocation3], %s513
        %s515 = sand.u32 %s41, 1
        %s516 = smul.addr %s515, 16
        %s517 = scalar_lea.vmem [#allocation2], %s516
        %p518 = pneg %p54
        %p519 = pneg %p51
        %s520 = sand.u32 %s33, 1
        %s521 = scalar_lea.sflag [#allocation6], %s520
        %s522 = sand.u32 %s67, 1
        %s523 = smul.addr %s522, 16
        %s524 = scalar_lea.vmem [#allocation5], %s523
        %p525 = pneg %p80
        %p526 = pneg %p77
        %s527 = sand.u32 %s33, 1
        %s528 = scalar_lea.sflag [#allocation6], %s527
        %s529 = sand.u32 %s93, 1
        %s530 = smul.addr %s529, 16
        %s531 = scalar_lea.vmem [#allocation7], %s530
        %p532 = pneg %p106
        %p533 = pneg %p103
        %p534 = pneg %p127
        %p535 = pneg %p124
        %p536 = pneg %p148
        %p537 = pneg %p145
        %p538 = pneg %p169
        %p539 = pneg %p166
        %p540 = pneg %p190
        %p541 = pneg %p187
        %p542 = pneg %p211
        %p543 = pneg %p208
        %p544 = pneg %p232
        %p545 = pneg %p229
        %p546 = pneg %p253
        %p547 = pneg %p250
        %p548 = pneg %p274
        %p549 = pneg %p271
        %p550 = pneg %p300
        %p551 = pneg %p297
        %s552 = sand.u32 %s287, 1
        %s553 = scalar_lea.sflag [#allocation4], %s552
        %s554 = sand.u32 %s287, 1
        %s555 = smul.addr %s554, 32
        %s556 = scalar_lea.vmem [#allocation14], %s555
        %s557 = smul.u32 2, %s33
        %s558 = smul.u32 2, %s33
        %s559 = smul.u32 2, %s33
        %s560 = smul.u32 2, %s33
        %v562 = vld [vmem:[%s467] sm:$0xf]
        %v563 = vld [vmem:[%s467 + $0x4] sm:$0xf]
        %v564 = vld [vmem:[%s467 + $0x8] sm:$0xf]
        %v565 = vld [vmem:[%s467 + $0xc] sm:$0xf]
        %v566 = vld [vmem:[%s477] sm:$0xf]
        %v567 = vld [vmem:[%s477 + $0x4] sm:$0xf]
        %v568 = vld [vmem:[%s477 + $0x8] sm:$0xf]
        %v569 = vld [vmem:[%s477 + $0xc] sm:$0xf]
        %v570 = vld [vmem:[%s487] sm:$0xf]
        %v571 = vld [vmem:[%s487 + $0x4] sm:$0xf]
        %v572 = vld [vmem:[%s487 + $0x8] sm:$0xf]
        %v573 = vld [vmem:[%s487 + $0xc] sm:$0xf]
        %v574 = vld [vmem:[#allocation8] sm:$0xf]
        %v575 = vld [vmem:[#allocation8 + $0x4] sm:$0xf]
        %v576 = vld [vmem:[#allocation8 + $0x8] sm:$0xf]
        %v577 = vld [vmem:[#allocation8 + $0xc] sm:$0xf]
        %v578 = vld [vmem:[#allocation8 + $0x10] sm:$0xf]
        %v579 = vld [vmem:[#allocation8 + $0x14] sm:$0xf]
        %v580 = vld [vmem:[#allocation8 + $0x18] sm:$0xf]
        %v581 = vld [vmem:[#allocation8 + $0x1c] sm:$0xf]
        %v582 = vld [vmem:[#allocation8 + $0x20] sm:$0xf]
        %v583 = vld [vmem:[#allocation8 + $0x24] sm:$0xf]
        %v584 = vld [vmem:[#allocation8 + $0x28] sm:$0xf]
        %v585 = vld [vmem:[#allocation8 + $0x2c] sm:$0xf]
        %v586 = vld [vmem:[#allocation8 + $0x30] sm:$0xf]
        %v587 = vld [vmem:[#allocation8 + $0x34] sm:$0xf]
        %v588 = vld [vmem:[#allocation8 + $0x38] sm:$0xf]
        %v589 = vld [vmem:[#allocation8 + $0x3c] sm:$0xf]
        %v590 = vld [vmem:[%s4] sm:$0x1]
        %v592 = vperm.slane %v590, 0
        %v598 = vunpack.c.l.b16 %v562
        %v599 = vunpack.c.l.b16 %v563
        %v600 = vunpack.c.l.b16 %v564
        %v601 = vunpack.c.l.b16 %v565
        %v602 = vpack.c.b16 %v599, %v598
        %v603 = vpack.c.b16 %v601, %v600
        %v622 = vunpack.c.l.b16 %v574
        %v623 = vunpack.c.l.b16 %v575
        %v624 = vunpack.c.l.b16 %v576
        %v625 = vunpack.c.l.b16 %v577
        %v626 = vunpack.c.l.b16 %v578
        %v627 = vunpack.c.l.b16 %v579
        %v628 = vunpack.c.l.b16 %v580
        %v629 = vunpack.c.l.b16 %v581
        %v630 = vunpack.c.l.b16 %v582
        %v631 = vunpack.c.l.b16 %v583
        %v632 = vunpack.c.l.b16 %v584
        %v633 = vunpack.c.l.b16 %v585
        %v634 = vunpack.c.l.b16 %v586
        %v635 = vunpack.c.l.b16 %v587
        %v636 = vunpack.c.l.b16 %v588
        %v637 = vunpack.c.l.b16 %v589
        %v638 = vpack.c.b16 %v623, %v622
        %v639 = vpack.c.b16 %v625, %v624
        %v640 = vpack.c.b16 %v627, %v626
        %v641 = vpack.c.b16 %v629, %v628
        %v642 = vpack.c.b16 %v631, %v630
        %v643 = vpack.c.b16 %v633, %v632
        %v644 = vpack.c.b16 %v635, %v634
        %v645 = vpack.c.b16 %v637, %v636
        %654 = vmatpush.bf16.msra.mxu0 %v645
        %655 = vmatpush.bf16.msra.mxu0 %v644
        %656 = vmatpush.bf16.msra.mxu0 %v643
        %657 = vmatpush.bf16.msra.mxu0 %v642
        %658 = vmatpush.bf16.msra.mxu0 %v641
        %659 = vmatpush.bf16.msra.mxu0 %v640
        %660 = vmatpush.bf16.msra.mxu0 %v639
        %661 = vmatpush.bf16.msra.mxu0 %v638
        %662 = vmatmul.bf16.gmra.mxu0 %v602
        %v663 = vpop.f32.mrf.mxu0
        %v664 = vadd.f32 %v592, %v663
        %v665 = vpop.f32.mrf.mxu0
        %v666 = vadd.f32 %v592, %v665
        %667 = vmatmul.bf16.gmra.mxu0 %v603
        %v668 = vpop.f32.mrf.mxu0
        %v669 = vadd.f32 %v592, %v668
        %v670 = vpop.f32.mrf.mxu0
        %v671 = vadd.f32 %v592, %v670
        %672 = vdwg.mxu0
        %v673 = vld [vmem:[#allocation10] sm:$0xf]
        %v674 = vld [vmem:[#allocation10 + $0x4] sm:$0xf]
        %v675 = vld [vmem:[#allocation10 + $0x8] sm:$0xf]
        %v676 = vld [vmem:[#allocation10 + $0xc] sm:$0xf]
        %v677 = vld [vmem:[#allocation10 + $0x10] sm:$0xf]
        %v678 = vld [vmem:[#allocation10 + $0x14] sm:$0xf]
        %v679 = vld [vmem:[#allocation10 + $0x18] sm:$0xf]
        %v680 = vld [vmem:[#allocation10 + $0x1c] sm:$0xf]
        %v681 = vld [vmem:[#allocation10 + $0x20] sm:$0xf]
        %v682 = vld [vmem:[#allocation10 + $0x24] sm:$0xf]
        %v683 = vld [vmem:[#allocation10 + $0x28] sm:$0xf]
        %v684 = vld [vmem:[#allocation10 + $0x2c] sm:$0xf]
        %v685 = vld [vmem:[#allocation10 + $0x30] sm:$0xf]
        %v686 = vld [vmem:[#allocation10 + $0x34] sm:$0xf]
        %v687 = vld [vmem:[#allocation10 + $0x38] sm:$0xf]
        %v688 = vld [vmem:[#allocation10 + $0x3c] sm:$0xf]
        %v689 = vld [vmem:[%s6] sm:$0x1]
        %v691 = vperm.slane %v689, 0
        %v697 = vunpack.c.l.b16 %v566
        %v698 = vunpack.c.l.b16 %v567
        %v699 = vunpack.c.l.b16 %v568
        %v700 = vunpack.c.l.b16 %v569
        %v701 = vpack.c.b16 %v698, %v697
        %v702 = vpack.c.b16 %v700, %v699
        %v721 = vunpack.c.l.b16 %v673
        %v722 = vunpack.c.l.b16 %v674
        %v723 = vunpack.c.l.b16 %v675
        %v724 = vunpack.c.l.b16 %v676
        %v725 = vunpack.c.l.b16 %v677
        %v726 = vunpack.c.l.b16 %v678
        %v727 = vunpack.c.l.b16 %v679
        %v728 = vunpack.c.l.b16 %v680
        %v729 = vunpack.c.l.b16 %v681
        %v730 = vunpack.c.l.b16 %v682
        %v731 = vunpack.c.l.b16 %v683
        %v732 = vunpack.c.l.b16 %v684
        %v733 = vunpack.c.l.b16 %v685
        %v734 = vunpack.c.l.b16 %v686
        %v735 = vunpack.c.l.b16 %v687
        %v736 = vunpack.c.l.b16 %v688
        %v737 = vpack.c.b16 %v722, %v721
        %v738 = vpack.c.b16 %v724, %v723
        %v739 = vpack.c.b16 %v726, %v725
        %v740 = vpack.c.b16 %v728, %v727
        %v741 = vpack.c.b16 %v730, %v729
        %v742 = vpack.c.b16 %v732, %v731
        %v743 = vpack.c.b16 %v734, %v733
        %v744 = vpack.c.b16 %v736, %v735
        %753 = vmatpush.bf16.msra.mxu0 %v744
        %754 = vmatpush.bf16.msra.mxu0 %v743
        %755 = vmatpush.bf16.msra.mxu0 %v742
        %756 = vmatpush.bf16.msra.mxu0 %v741
        %757 = vmatpush.bf16.msra.mxu0 %v740
        %758 = vmatpush.bf16.msra.mxu0 %v739
        %759 = vmatpush.bf16.msra.mxu0 %v738
        %760 = vmatpush.bf16.msra.mxu0 %v737
        %761 = vmatmul.bf16.gmra.mxu0 %v701
        %v762 = vpop.f32.mrf.mxu0
        %v763 = vadd.f32 %v691, %v762
        %v764 = vpop.f32.mrf.mxu0
        %v765 = vadd.f32 %v691, %v764
        %766 = vmatmul.bf16.gmra.mxu0 %v702
        %v767 = vpop.f32.mrf.mxu0
        %v768 = vadd.f32 %v691, %v767
        %v769 = vpop.f32.mrf.mxu0
        %v770 = vadd.f32 %v691, %v769
        %771 = vdwg.mxu0
        %v772 = vld [vmem:[#allocation11] sm:$0xf]
        %v773 = vld [vmem:[#allocation11 + $0x4] sm:$0xf]
        %v774 = vld [vmem:[#allocation11 + $0x8] sm:$0xf]
        %v775 = vld [vmem:[#allocation11 + $0xc] sm:$0xf]
        %v776 = vld [vmem:[#allocation11 + $0x10] sm:$0xf]
        %v777 = vld [vmem:[#allocation11 + $0x14] sm:$0xf]
        %v778 = vld [vmem:[#allocation11 + $0x18] sm:$0xf]
        %v779 = vld [vmem:[#allocation11 + $0x1c] sm:$0xf]
        %v780 = vld [vmem:[#allocation11 + $0x20] sm:$0xf]
        %v781 = vld [vmem:[#allocation11 + $0x24] sm:$0xf]
        %v782 = vld [vmem:[#allocation11 + $0x28] sm:$0xf]
        %v783 = vld [vmem:[#allocation11 + $0x2c] sm:$0xf]
        %v784 = vld [vmem:[#allocation11 + $0x30] sm:$0xf]
        %v785 = vld [vmem:[#allocation11 + $0x34] sm:$0xf]
        %v786 = vld [vmem:[#allocation11 + $0x38] sm:$0xf]
        %v787 = vld [vmem:[#allocation11 + $0x3c] sm:$0xf]
        %v788 = vld [vmem:[%s8] sm:$0x1]
        %v790 = vperm.slane %v788, 0
        %v796 = vunpack.c.l.b16 %v570
        %v797 = vunpack.c.l.b16 %v571
        %v798 = vunpack.c.l.b16 %v572
        %v799 = vunpack.c.l.b16 %v573
        %v800 = vpack.c.b16 %v797, %v796
        %v801 = vpack.c.b16 %v799, %v798
        %v820 = vunpack.c.l.b16 %v772
        %v821 = vunpack.c.l.b16 %v773
        %v822 = vunpack.c.l.b16 %v774
        %v823 = vunpack.c.l.b16 %v775
        %v824 = vunpack.c.l.b16 %v776
        %v825 = vunpack.c.l.b16 %v777
        %v826 = vunpack.c.l.b16 %v778
        %v827 = vunpack.c.l.b16 %v779
        %v828 = vunpack.c.l.b16 %v780
        %v829 = vunpack.c.l.b16 %v781
        %v830 = vunpack.c.l.b16 %v782
        %v831 = vunpack.c.l.b16 %v783
        %v832 = vunpack.c.l.b16 %v784
        %v833 = vunpack.c.l.b16 %v785
        %v834 = vunpack.c.l.b16 %v786
        %v835 = vunpack.c.l.b16 %v787
        %v836 = vpack.c.b16 %v821, %v820
        %v837 = vpack.c.b16 %v823, %v822
        %v838 = vpack.c.b16 %v825, %v824
        %v839 = vpack.c.b16 %v827, %v826
        %v840 = vpack.c.b16 %v829, %v828
        %v841 = vpack.c.b16 %v831, %v830
        %v842 = vpack.c.b16 %v833, %v832
        %v843 = vpack.c.b16 %v835, %v834
        %852 = vmatpush.bf16.msra.mxu0 %v843
        %853 = vmatpush.bf16.msra.mxu0 %v842
        %854 = vmatpush.bf16.msra.mxu0 %v841
        %855 = vmatpush.bf16.msra.mxu0 %v840
        %856 = vmatpush.bf16.msra.mxu0 %v839
        %857 = vmatpush.bf16.msra.mxu0 %v838
        %858 = vmatpush.bf16.msra.mxu0 %v837
        %859 = vmatpush.bf16.msra.mxu0 %v836
        %860 = vmatmul.bf16.gmra.mxu0 %v800
        %v861 = vpop.f32.mrf.mxu0
        %v862 = vadd.f32 %v790, %v861
        %v863 = vpop.f32.mrf.mxu0
        %v864 = vadd.f32 %v790, %v863
        %865 = vmatmul.bf16.gmra.mxu0 %v801
        %v866 = vpop.f32.mrf.mxu0
        %v867 = vadd.f32 %v790, %v866
        %v868 = vpop.f32.mrf.mxu0
        %v869 = vadd.f32 %v790, %v868
        %870 = vdwg.mxu0
        %v871 = vpack.c.bf16 %v664, %v664
        %v872 = vpack.c.bf16 %v666, %v666
        %v873 = vpack.c.bf16 %v669, %v669
        %v874 = vpack.c.bf16 %v671, %v671
        %v875 = vpack.c.bf16 %v763, %v763
        %v876 = vpack.c.bf16 %v765, %v765
        %v877 = vpack.c.bf16 %v768, %v768
        %v878 = vpack.c.bf16 %v770, %v770
        %v879 = vpack.c.bf16 %v862, %v862
        %v880 = vpack.c.bf16 %v864, %v864
        %v881 = vpack.c.bf16 %v867, %v867
        %v882 = vpack.c.bf16 %v869, %v869
        %v883 = vld [vmem:[%s10] sm:$0x1]
        %v885 = vperm.slane %v883, 0
        %v887 = vadd.f32 %v885, 0.0
        %v890 = vunpack.c.l.b16 %v871
        %v891 = vunpack.c.l.b16 %v872
        %v892 = vpack.c.b16 %v891, %v890
        %v895 = vunpack.c.l.b16 %v875
        %v896 = vunpack.c.l.b16 %v876
        %v897 = vpack.c.b16 %v896, %v895
        %vm898 = vcmask 261120
        %v900 = vsel %vm898, %v892, 0
        %v903 = vsel %vm898, %v897, 0
        %905 = vmatpush.bf16.xpose.msra.mxu0 0
        %906 = vmatpush.bf16.xpose.msra.mxu0 0
        %907 = vmatpush.bf16.xpose.msra.mxu0 0
        %908 = vmatpush.bf16.xpose.msra.mxu0 0
        %909 = vmatpush.bf16.xpose.msra.mxu0 0
        %910 = vmatpush.bf16.xpose.msra.mxu0 0
        %911 = vmatpush.bf16.xpose.msra.mxu0 0
        %912 = vmatpush.bf16.xpose.msra.mxu0 %v903
        %913 = vmatmul.bf16.gmra.mxu0 %v900
        %v914 = vpop.f32.mrf.mxu0
        %v915 = vadd.f32 0.0, %v914
        %v916 = vpop.f32.mrf.mxu0
        %v917 = vadd.f32 0.0, %v916
        %918 = vdwg.mxu0
        %v921 = vunpack.c.l.b16 %v873
        %v922 = vunpack.c.l.b16 %v874
        %v923 = vpack.c.b16 %v922, %v921
        %v926 = vunpack.c.l.b16 %v877
        %v927 = vunpack.c.l.b16 %v878
        %v928 = vpack.c.b16 %v927, %v926
        %v930 = vsel %vm898, %v923, 0
        %v933 = vsel %vm898, %v928, 0
        %935 = vmatpush.bf16.xpose.msra.mxu0 0
        %936 = vmatpush.bf16.xpose.msra.mxu0 0
        %937 = vmatpush.bf16.xpose.msra.mxu0 0
        %938 = vmatpush.bf16.xpose.msra.mxu0 0
        %939 = vmatpush.bf16.xpose.msra.mxu0 0
        %940 = vmatpush.bf16.xpose.msra.mxu0 0
        %941 = vmatpush.bf16.xpose.msra.mxu0 0
        %942 = vmatpush.bf16.xpose.msra.mxu0 %v933
        %943 = vmatmul.bf16.gmra.mxu0 %v930
        %v944 = vpop.f32.mrf.mxu0
        %v945 = vadd.f32 0.0, %v944
        %v946 = vpop.f32.mrf.mxu0
        %v947 = vadd.f32 0.0, %v946
        %948 = vdwg.mxu0
        %v949 = vmul.f32 %v915, 0.17677669
        %v950 = vmul.f32 %v917, 0.17677669
        %v951 = vmul.f32 %v945, 0.17677669
        %v952 = vmul.f32 %v947, 0.17677669
        %vm953 = vcmask 130048
        %v954 = vsel %vm953, %v949, -inf
        %955 = vmax.xlane.f32.xlu0 %v954
        %v956 = vpop.xlane.xlu0 %955
        %v957 = vsel %vm953, %v950, -inf
        %958 = vmax.xlane.f32.xlu0 %v957
        %v959 = vpop.xlane.xlu0 %958
        %v960 = vsel %vm953, %v951, -inf
        %961 = vmax.xlane.f32.xlu0 %v960
        %v962 = vpop.xlane.xlu0 %961
        %v963 = vsel %vm953, %v952, -inf
        %964 = vmax.xlane.f32.xlu0 %v963
        %v965 = vpop.xlane.xlu0 %964
        %v966 = vsub.f32 %v949, %v956
        %v967 = vsub.f32 %v950, %v959
        %v968 = vsub.f32 %v951, %v962
        %v969 = vsub.f32 %v952, %v965
        %v970 = vmul.f32 %v966, 1.442695
        %v971 = vpow.pop %v970
        %v972 = vmul.f32 %v967, 1.442695
        %v973 = vpow.pop %v972
        %v974 = vmul.f32 %v968, 1.442695
        %v975 = vpow.pop %v974
        %v976 = vmul.f32 %v969, 1.442695
        %v977 = vpow.pop %v976
        %v978 = vsel %vm953, %v971, 0.0
        %979 = vadd.xlane.f32.xlu0 %v978
        %v980 = vpop.xlane.xlu0 %979
        %v981 = vsel %vm953, %v973, 0.0
        %982 = vadd.xlane.f32.xlu0 %v981
        %v983 = vpop.xlane.xlu0 %982
        %v984 = vsel %vm953, %v975, 0.0
        %985 = vadd.xlane.f32.xlu0 %v984
        %v986 = vpop.xlane.xlu0 %985
        %v987 = vsel %vm953, %v977, 0.0
        %988 = vadd.xlane.f32.xlu0 %v987
        %v989 = vpop.xlane.xlu0 %988
        %v990 = vrcp.pop %v980
        %v991 = vrcp.pop %v983
        %v992 = vrcp.pop %v986
        %v993 = vrcp.pop %v989
        %v994 = vmul.f32 %v971, %v990
        %v995 = vmul.f32 %v973, %v991
        %v996 = vmul.f32 %v975, %v992
        %v997 = vmul.f32 %v977, %v993
        %v998 = vpack.c.bf16 %v994, %v994
        %v999 = vpack.c.bf16 %v995, %v995
        %v1000 = vpack.c.bf16 %v996, %v996
        %v1001 = vpack.c.bf16 %v997, %v997
        %v1004 = vunpack.c.l.b16 %v998
        %v1005 = vunpack.c.l.b16 %v999
        %v1006 = vpack.c.b16 %v1005, %v1004
        %v1009 = vunpack.c.l.b16 %v879
        %v1010 = vunpack.c.l.b16 %v880
        %v1011 = vpack.c.b16 %v1010, %v1009
        %v1014 = vsel %vm953, %v1006, 0
        %1016 = vmatpush.bf16.msra.mxu0 0
        %1017 = vmatpush.bf16.msra.mxu0 0
        %1018 = vmatpush.bf16.msra.mxu0 0
        %1019 = vmatpush.bf16.msra.mxu0 0
        %1020 = vmatpush.bf16.msra.mxu0 0
        %1021 = vmatpush.bf16.msra.mxu0 0
        %1022 = vmatpush.bf16.msra.mxu0 0
        %1023 = vmatpush.bf16.msra.mxu0 %v1011
        %1024 = vmatmul.bf16.gmra.mxu0 %v1014
        %v1025 = vpop.f32.mrf.mxu0
        %v1026 = vadd.f32 0.0, %v1025
        %v1027 = vpop.f32.mrf.mxu0
        %v1028 = vadd.f32 0.0, %v1027
        %1029 = vdwg.mxu0
        %v1032 = vunpack.c.l.b16 %v1000
        %v1033 = vunpack.c.l.b16 %v1001
        %v1034 = vpack.c.b16 %v1033, %v1032
        %v1037 = vunpack.c.l.b16 %v881
        %v1038 = vunpack.c.l.b16 %v882
        %v1039 = vpack.c.b16 %v1038, %v1037
        %v1042 = vsel %vm953, %v1034, 0
        %1044 = vmatpush.bf16.msra.mxu0 0
        %1045 = vmatpush.bf16.msra.mxu0 0
        %1046 = vmatpush.bf16.msra.mxu0 0
        %1047 = vmatpush.bf16.msra.mxu0 0
        %1048 = vmatpush.bf16.msra.mxu0 0
        %1049 = vmatpush.bf16.msra.mxu0 0
        %1050 = vmatpush.bf16.msra.mxu0 0
        %1051 = vmatpush.bf16.msra.mxu0 %v1039
        %1052 = vmatmul.bf16.gmra.mxu0 %v1042
        %v1053 = vpop.f32.mrf.mxu0
        %v1054 = vadd.f32 0.0, %v1053
        %v1055 = vpop.f32.mrf.mxu0
        %v1056 = vadd.f32 0.0, %v1055
        %1057 = vdwg.mxu0
        %v1058 = vpack.c.bf16 %v1028, %v1026
        %v1059 = vpack.c.bf16 %v1056, %v1054
        %v1060 = vld [vmem:[#allocation13] sm:$0xf]
        %v1061 = vld [vmem:[#allocation13 + $0x4] sm:$0xf]
        %v1062 = vld [vmem:[#allocation13 + $0x8] sm:$0xf]
        %v1063 = vld [vmem:[#allocation13 + $0xc] sm:$0xf]
        %v1068 = vunpack.c.l.b16 %v1060
        %v1069 = vunpack.c.l.b16 %v1061
        %v1070 = vunpack.c.l.b16 %v1062
        %v1071 = vunpack.c.l.b16 %v1063
        %v1072 = vpack.c.b16 %v1069, %v1068
        %v1073 = vpack.c.b16 %v1071, %v1070
        %v1077 = vsel %vm898, %v1058, 0
        %v1080 = vsel %vm898, %v1059, 0
        %1082 = vmatpush.bf16.msra.mxu0 0
        %1083 = vmatpush.bf16.msra.mxu0 0
        %1084 = vmatpush.bf16.msra.mxu0 0
        %1085 = vmatpush.bf16.msra.mxu0 0
        %1086 = vmatpush.bf16.msra.mxu0 0
        %1087 = vmatpush.bf16.msra.mxu0 0
        %1088 = vmatpush.bf16.msra.mxu0 %v1073
        %1089 = vmatpush.bf16.msra.mxu0 %v1072
        %1090 = vmatmul.bf16.gmra.mxu0 %v1077
        %v1091 = vpop.f32.mrf.mxu0
        %v1092 = vadd.f32 0.0, %v1091
        %v1093 = vpop.f32.mrf.mxu0
        %v1094 = vadd.f32 0.0, %v1093
        %1095 = vmatmul.bf16.gmra.mxu0 %v1080
        %v1096 = vpop.f32.mrf.mxu0
        %v1097 = vadd.f32 0.0, %v1096
        %v1098 = vpop.f32.mrf.mxu0
        %v1099 = vadd.f32 0.0, %v1098
        %1100 = vdwg.mxu0
        %v1101 = vadd.f32 %v887, %v1092
        %v1102 = vadd.f32 %v887, %v1094
        %v1103 = vadd.f32 %v887, %v1097
        %v1104 = vadd.f32 %v887, %v1099
        %1105 = vrot.lane.b32.xlu0 %v892, 96
        %v1106 = vpop.permute.xlu0 %1105
        %1107 = vrot.lane.b32.xlu0 %v897, 96
        %v1108 = vpop.permute.xlu0 %1107
        %v1110 = vsel %vm898, %v1106, 0
        %v1113 = vsel %vm898, %v1108, 0
        %1115 = vmatpush.bf16.xpose.msra.mxu0 0
        %1116 = vmatpush.bf16.xpose.msra.mxu0 0
        %1117 = vmatpush.bf16.xpose.msra.mxu0 0
        %1118 = vmatpush.bf16.xpose.msra.mxu0 0
        %1119 = vmatpush.bf16.xpose.msra.mxu0 0
        %1120 = vmatpush.bf16.xpose.msra.mxu0 0
        %1121 = vmatpush.bf16.xpose.msra.mxu0 0
        %1122 = vmatpush.bf16.xpose.msra.mxu0 %v1113
        %1123 = vmatmul.bf16.gmra.mxu0 %v1110
        %v1124 = vpop.f32.mrf.mxu0
        %v1125 = vadd.f32 0.0, %v1124
        %v1126 = vpop.f32.mrf.mxu0
        %v1127 = vadd.f32 0.0, %v1126
        %1128 = vdwg.mxu0
        %1129 = vrot.lane.b32.xlu0 %v923, 96
        %v1130 = vpop.permute.xlu0 %1129
        %1131 = vrot.lane.b32.xlu0 %v928, 96
        %v1132 = vpop.permute.xlu0 %1131
        %v1134 = vsel %vm898, %v1130, 0
        %v1137 = vsel %vm898, %v1132, 0
        %1139 = vmatpush.bf16.xpose.msra.mxu0 0
        %1140 = vmatpush.bf16.xpose.msra.mxu0 0
        %1141 = vmatpush.bf16.xpose.msra.mxu0 0
        %1142 = vmatpush.bf16.xpose.msra.mxu0 0
        %1143 = vmatpush.bf16.xpose.msra.mxu0 0
        %1144 = vmatpush.bf16.xpose.msra.mxu0 0
        %1145 = vmatpush.bf16.xpose.msra.mxu0 0
        %1146 = vmatpush.bf16.xpose.msra.mxu0 %v1137
        %1147 = vmatmul.bf16.gmra.mxu0 %v1134
        %v1148 = vpop.f32.mrf.mxu0
        %v1149 = vadd.f32 0.0, %v1148
        %v1150 = vpop.f32.mrf.mxu0
        %v1151 = vadd.f32 0.0, %v1150
        %1152 = vdwg.mxu0
        %v1153 = vmul.f32 %v1125, 0.17677669
        %v1154 = vmul.f32 %v1127, 0.17677669
        %v1155 = vmul.f32 %v1149, 0.17677669
        %v1156 = vmul.f32 %v1151, 0.17677669
        %v1157 = vsel %vm953, %v1153, -inf
        %1158 = vmax.xlane.f32.xlu0 %v1157
        %v1159 = vpop.xlane.xlu0 %1158
        %v1160 = vsel %vm953, %v1154, -inf
        %1161 = vmax.xlane.f32.xlu0 %v1160
        %v1162 = vpop.xlane.xlu0 %1161
        %v1163 = vsel %vm953, %v1155, -inf
        %1164 = vmax.xlane.f32.xlu0 %v1163
        %v1165 = vpop.xlane.xlu0 %1164
        %v1166 = vsel %vm953, %v1156, -inf
        %1167 = vmax.xlane.f32.xlu0 %v1166
        %v1168 = vpop.xlane.xlu0 %1167
        %v1169 = vsub.f32 %v1153, %v1159
        %v1170 = vsub.f32 %v1154, %v1162
        %v1171 = vsub.f32 %v1155, %v1165
        %v1172 = vsub.f32 %v1156, %v1168
        %v1173 = vmul.f32 %v1169, 1.442695
        %v1174 = vpow.pop %v1173
        %v1175 = vmul.f32 %v1170, 1.442695
        %v1176 = vpow.pop %v1175
        %v1177 = vmul.f32 %v1171, 1.442695
        %v1178 = vpow.pop %v1177
        %v1179 = vmul.f32 %v1172, 1.442695
        %v1180 = vpow.pop %v1179
        %v1181 = vsel %vm953, %v1174, 0.0
        %1182 = vadd.xlane.f32.xlu0 %v1181
        %v1183 = vpop.xlane.xlu0 %1182
        %v1184 = vsel %vm953, %v1176, 0.0
        %1185 = vadd.xlane.f32.xlu0 %v1184
        %v1186 = vpop.xlane.xlu0 %1185
        %v1187 = vsel %vm953, %v1178, 0.0
        %1188 = vadd.xlane.f32.xlu0 %v1187
        %v1189 = vpop.xlane.xlu0 %1188
        %v1190 = vsel %vm953, %v1180, 0.0
        %1191 = vadd.xlane.f32.xlu0 %v1190
        %v1192 = vpop.xlane.xlu0 %1191
        %v1193 = vrcp.pop %v1183
        %v1194 = vrcp.pop %v1186
        %v1195 = vrcp.pop %v1189
        %v1196 = vrcp.pop %v1192
        %v1197 = vmul.f32 %v1174, %v1193
        %v1198 = vmul.f32 %v1176, %v1194
        %v1199 = vmul.f32 %v1178, %v1195
        %v1200 = vmul.f32 %v1180, %v1196
        %v1201 = vpack.c.bf16 %v1197, %v1197
        %v1202 = vpack.c.bf16 %v1198, %v1198
        %v1203 = vpack.c.bf16 %v1199, %v1199
        %v1204 = vpack.c.bf16 %v1200, %v1200
        %v1207 = vunpack.c.l.b16 %v1201
        %v1208 = vunpack.c.l.b16 %v1202
        %v1209 = vpack.c.b16 %v1208, %v1207
        %1210 = vrot.lane.b32.xlu0 %v1011, 96
        %v1211 = vpop.permute.xlu0 %1210
        %v1214 = vsel %vm953, %v1209, 0
        %1216 = vmatpush.bf16.msra.mxu0 0
        %1217 = vmatpush.bf16.msra.mxu0 0
        %1218 = vmatpush.bf16.msra.mxu0 0
        %1219 = vmatpush.bf16.msra.mxu0 0
        %1220 = vmatpush.bf16.msra.mxu0 0
        %1221 = vmatpush.bf16.msra.mxu0 0
        %1222 = vmatpush.bf16.msra.mxu0 0
        %1223 = vmatpush.bf16.msra.mxu0 %v1211
        %1224 = vmatmul.bf16.gmra.mxu0 %v1214
        %v1225 = vpop.f32.mrf.mxu0
        %v1226 = vadd.f32 0.0, %v1225
        %v1227 = vpop.f32.mrf.mxu0
        %v1228 = vadd.f32 0.0, %v1227
        %1229 = vdwg.mxu0
        %v1232 = vunpack.c.l.b16 %v1203
        %v1233 = vunpack.c.l.b16 %v1204
        %v1234 = vpack.c.b16 %v1233, %v1232
        %1235 = vrot.lane.b32.xlu0 %v1039, 96
        %v1236 = vpop.permute.xlu0 %1235
        %v1239 = vsel %vm953, %v1234, 0
        %1241 = vmatpush.bf16.msra.mxu0 0
        %1242 = vmatpush.bf16.msra.mxu0 0
        %1243 = vmatpush.bf16.msra.mxu0 0
        %1244 = vmatpush.bf16.msra.mxu0 0
        %1245 = vmatpush.bf16.msra.mxu0 0
        %1246 = vmatpush.bf16.msra.mxu0 0
        %1247 = vmatpush.bf16.msra.mxu0 0
        %1248 = vmatpush.bf16.msra.mxu0 %v1236
        %1249 = vmatmul.bf16.gmra.mxu0 %v1239
        %v1250 = vpop.f32.mrf.mxu0
        %v1251 = vadd.f32 0.0, %v1250
        %v1252 = vpop.f32.mrf.mxu0
        %v1253 = vadd.f32 0.0, %v1252
        %1254 = vdwg.mxu0
        %v1255 = vpack.c.bf16 %v1228, %v1226
        %v1256 = vpack.c.bf16 %v1253, %v1251
        %v1257 = vld [vmem:[#allocation13 + $0x10] sm:$0xf]
        %v1258 = vld [vmem:[#allocation13 + $0x14] sm:$0xf]
        %v1259 = vld [vmem:[#allocation13 + $0x18] sm:$0xf]
        %v1260 = vld [vmem:[#allocation13 + $0x1c] sm:$0xf]
        %v1265 = vunpack.c.l.b16 %v1257
        %v1266 = vunpack.c.l.b16 %v1258
        %v1267 = vunpack.c.l.b16 %v1259
        %v1268 = vunpack.c.l.b16 %v1260
        %v1269 = vpack.c.b16 %v1266, %v1265
        %v1270 = vpack.c.b16 %v1268, %v1267
        %v1274 = vsel %vm898, %v1255, 0
        %v1277 = vsel %vm898, %v1256, 0
        %1279 = vmatpush.bf16.msra.mxu0 0
        %1280 = vmatpush.bf16.msra.mxu0 0
        %1281 = vmatpush.bf16.msra.mxu0 0
        %1282 = vmatpush.bf16.msra.mxu0 0
        %1283 = vmatpush.bf16.msra.mxu0 0
        %1284 = vmatpush.bf16.msra.mxu0 0
        %1285 = vmatpush.bf16.msra.mxu0 %v1270
        %1286 = vmatpush.bf16.msra.mxu0 %v1269
        %1287 = vmatmul.bf16.gmra.mxu0 %v1274
        %v1288 = vpop.f32.mrf.mxu0
        %v1289 = vadd.f32 0.0, %v1288
        %v1290 = vpop.f32.mrf.mxu0
        %v1291 = vadd.f32 0.0, %v1290
        %1292 = vmatmul.bf16.gmra.mxu0 %v1277
        %v1293 = vpop.f32.mrf.mxu0
        %v1294 = vadd.f32 0.0, %v1293
        %v1295 = vpop.f32.mrf.mxu0
        %v1296 = vadd.f32 0.0, %v1295
        %1297 = vdwg.mxu0
        %v1298 = vadd.f32 %v1101, %v1289
        %v1299 = vadd.f32 %v1102, %v1291
        %v1300 = vadd.f32 %v1103, %v1294
        %v1301 = vadd.f32 %v1104, %v1296
        %1302 = vrot.lane.b32.xlu0 %v892, 64
        %v1303 = vpop.permute.xlu0 %1302
        %1304 = vrot.lane.b32.xlu0 %v897, 64
        %v1305 = vpop.permute.xlu0 %1304
        %v1307 = vsel %vm898, %v1303, 0
        %v1310 = vsel %vm898, %v1305, 0
        %1312 = vmatpush.bf16.xpose.msra.mxu0 0
        %1313 = vmatpush.bf16.xpose.msra.mxu0 0
        %1314 = vmatpush.bf16.xpose.msra.mxu0 0
        %1315 = vmatpush.bf16.xpose.msra.mxu0 0
        %1316 = vmatpush.bf16.xpose.msra.mxu0 0
        %1317 = vmatpush.bf16.xpose.msra.mxu0 0
        %1318 = vmatpush.bf16.xpose.msra.mxu0 0
        %1319 = vmatpush.bf16.xpose.msra.mxu0 %v1310
        %1320 = vmatmul.bf16.gmra.mxu0 %v1307
        %v1321 = vpop.f32.mrf.mxu0
        %v1322 = vadd.f32 0.0, %v1321
        %v1323 = vpop.f32.mrf.mxu0
        %v1324 = vadd.f32 0.0, %v1323
        %1325 = vdwg.mxu0
        %1326 = vrot.lane.b32.xlu0 %v923, 64
        %v1327 = vpop.permute.xlu0 %1326
        %1328 = vrot.lane.b32.xlu0 %v928, 64
        %v1329 = vpop.permute.xlu0 %1328
        %v1331 = vsel %vm898, %v1327, 0
        %v1334 = vsel %vm898, %v1329, 0
        %1336 = vmatpush.bf16.xpose.msra.mxu0 0
        %1337 = vmatpush.bf16.xpose.msra.mxu0 0
        %1338 = vmatpush.bf16.xpose.msra.mxu0 0
        %1339 = vmatpush.bf16.xpose.msra.mxu0 0
        %1340 = vmatpush.bf16.xpose.msra.mxu0 0
        %1341 = vmatpush.bf16.xpose.msra.mxu0 0
        %1342 = vmatpush.bf16.xpose.msra.mxu0 0
        %1343 = vmatpush.bf16.xpose.msra.mxu0 %v1334
        %1344 = vmatmul.bf16.gmra.mxu0 %v1331
        %v1345 = vpop.f32.mrf.mxu0
        %v1346 = vadd.f32 0.0, %v1345
        %v1347 = vpop.f32.mrf.mxu0
        %v1348 = vadd.f32 0.0, %v1347
        %1349 = vdwg.mxu0
        %v1350 = vmul.f32 %v1322, 0.17677669
        %v1351 = vmul.f32 %v1324, 0.17677669
        %v1352 = vmul.f32 %v1346, 0.17677669
        %v1353 = vmul.f32 %v1348, 0.17677669
        %v1354 = vsel %vm953, %v1350, -inf
        %1355 = vmax.xlane.f32.xlu0 %v1354
        %v1356 = vpop.xlane.xlu0 %1355
        %v1357 = vsel %vm953, %v1351, -inf
        %1358 = vmax.xlane.f32.xlu0 %v1357
        %v1359 = vpop.xlane.xlu0 %1358
        %v1360 = vsel %vm953, %v1352, -inf
        %1361 = vmax.xlane.f32.xlu0 %v1360
        %v1362 = vpop.xlane.xlu0 %1361
        %v1363 = vsel %vm953, %v1353, -inf
        %1364 = vmax.xlane.f32.xlu0 %v1363
        %v1365 = vpop.xlane.xlu0 %1364
        %v1366 = vsub.f32 %v1350, %v1356
        %v1367 = vsub.f32 %v1351, %v1359
        %v1368 = vsub.f32 %v1352, %v1362
        %v1369 = vsub.f32 %v1353, %v1365
        %v1370 = vmul.f32 %v1366, 1.442695
        %v1371 = vpow.pop %v1370
        %v1372 = vmul.f32 %v1367, 1.442695
        %v1373 = vpow.pop %v1372
        %v1374 = vmul.f32 %v1368, 1.442695
        %v1375 = vpow.pop %v1374
        %v1376 = vmul.f32 %v1369, 1.442695
        %v1377 = vpow.pop %v1376
        %v1378 = vsel %vm953, %v1371, 0.0
        %1379 = vadd.xlane.f32.xlu0 %v1378
        %v1380 = vpop.xlane.xlu0 %1379
        %v1381 = vsel %vm953, %v1373, 0.0
        %1382 = vadd.xlane.f32.xlu0 %v1381
        %v1383 = vpop.xlane.xlu0 %1382
        %v1384 = vsel %vm953, %v1375, 0.0
        %1385 = vadd.xlane.f32.xlu0 %v1384
        %v1386 = vpop.xlane.xlu0 %1385
        %v1387 = vsel %vm953, %v1377, 0.0
        %1388 = vadd.xlane.f32.xlu0 %v1387
        %v1389 = vpop.xlane.xlu0 %1388
        %v1390 = vrcp.pop %v1380
        %v1391 = vrcp.pop %v1383
        %v1392 = vrcp.pop %v1386
        %v1393 = vrcp.pop %v1389
        %v1394 = vmul.f32 %v1371, %v1390
        %v1395 = vmul.f32 %v1373, %v1391
        %v1396 = vmul.f32 %v1375, %v1392
        %v1397 = vmul.f32 %v1377, %v1393
        %v1398 = vpack.c.bf16 %v1394, %v1394
        %v1399 = vpack.c.bf16 %v1395, %v1395
        %v1400 = vpack.c.bf16 %v1396, %v1396
        %v1401 = vpack.c.bf16 %v1397, %v1397
        %v1404 = vunpack.c.l.b16 %v1398
        %v1405 = vunpack.c.l.b16 %v1399
        %v1406 = vpack.c.b16 %v1405, %v1404
        %1407 = vrot.lane.b32.xlu0 %v1011, 64
        %v1408 = vpop.permute.xlu0 %1407
        %v1411 = vsel %vm953, %v1406, 0
        %1413 = vmatpush.bf16.msra.mxu0 0
        %1414 = vmatpush.bf16.msra.mxu0 0
        %1415 = vmatpush.bf16.msra.mxu0 0
        %1416 = vmatpush.bf16.msra.mxu0 0
        %1417 = vmatpush.bf16.msra.mxu0 0
        %1418 = vmatpush.bf16.msra.mxu0 0
        %1419 = vmatpush.bf16.msra.mxu0 0
        %1420 = vmatpush.bf16.msra.mxu0 %v1408
        %1421 = vmatmul.bf16.gmra.mxu0 %v1411
        %v1422 = vpop.f32.mrf.mxu0
        %v1423 = vadd.f32 0.0, %v1422
        %v1424 = vpop.f32.mrf.mxu0
        %v1425 = vadd.f32 0.0, %v1424
        %1426 = vdwg.mxu0
        %v1429 = vunpack.c.l.b16 %v1400
        %v1430 = vunpack.c.l.b16 %v1401
        %v1431 = vpack.c.b16 %v1430, %v1429
        %1432 = vrot.lane.b32.xlu0 %v1039, 64
        %v1433 = vpop.permute.xlu0 %1432
        %v1436 = vsel %vm953, %v1431, 0
        %1438 = vmatpush.bf16.msra.mxu0 0
        %1439 = vmatpush.bf16.msra.mxu0 0
        %1440 = vmatpush.bf16.msra.mxu0 0
        %1441 = vmatpush.bf16.msra.mxu0 0
        %1442 = vmatpush.bf16.msra.mxu0 0
        %1443 = vmatpush.bf16.msra.mxu0 0
        %1444 = vmatpush.bf16.msra.mxu0 0
        %1445 = vmatpush.bf16.msra.mxu0 %v1433
        %1446 = vmatmul.bf16.gmra.mxu0 %v1436
        %v1447 = vpop.f32.mrf.mxu0
        %v1448 = vadd.f32 0.0, %v1447
        %v1449 = vpop.f32.mrf.mxu0
        %v1450 = vadd.f32 0.0, %v1449
        %1451 = vdwg.mxu0
        %v1452 = vpack.c.bf16 %v1425, %v1423
        %v1453 = vpack.c.bf16 %v1450, %v1448
        %v1454 = vld [vmem:[#allocation13 + $0x20] sm:$0xf]
        %v1455 = vld [vmem:[#allocation13 + $0x24] sm:$0xf]
        %v1456 = vld [vmem:[#allocation13 + $0x28] sm:$0xf]
        %v1457 = vld [vmem:[#allocation13 + $0x2c] sm:$0xf]
        %v1462 = vunpack.c.l.b16 %v1454
        %v1463 = vunpack.c.l.b16 %v1455
        %v1464 = vunpack.c.l.b16 %v1456
        %v1465 = vunpack.c.l.b16 %v1457
        %v1466 = vpack.c.b16 %v1463, %v1462
        %v1467 = vpack.c.b16 %v1465, %v1464
        %v1471 = vsel %vm898, %v1452, 0
        %v1474 = vsel %vm898, %v1453, 0
        %1476 = vmatpush.bf16.msra.mxu0 0
        %1477 = vmatpush.bf16.msra.mxu0 0
        %1478 = vmatpush.bf16.msra.mxu0 0
        %1479 = vmatpush.bf16.msra.mxu0 0
        %1480 = vmatpush.bf16.msra.mxu0 0
        %1481 = vmatpush.bf16.msra.mxu0 0
        %1482 = vmatpush.bf16.msra.mxu0 %v1467
        %1483 = vmatpush.bf16.msra.mxu0 %v1466
        %1484 = vmatmul.bf16.gmra.mxu0 %v1471
        %v1485 = vpop.f32.mrf.mxu0
        %v1486 = vadd.f32 0.0, %v1485
        %v1487 = vpop.f32.mrf.mxu0
        %v1488 = vadd.f32 0.0, %v1487
        %1489 = vmatmul.bf16.gmra.mxu0 %v1474
        %v1490 = vpop.f32.mrf.mxu0
        %v1491 = vadd.f32 0.0, %v1490
        %v1492 = vpop.f32.mrf.mxu0
        %v1493 = vadd.f32 0.0, %v1492
        %1494 = vdwg.mxu0
        %v1495 = vadd.f32 %v1298, %v1486
        %v1496 = vadd.f32 %v1299, %v1488
        %v1497 = vadd.f32 %v1300, %v1491
        %v1498 = vadd.f32 %v1301, %v1493
        %1499 = vrot.lane.b32.xlu0 %v892, 32
        %v1500 = vpop.permute.xlu0 %1499
        %1501 = vrot.lane.b32.xlu0 %v897, 32
        %v1502 = vpop.permute.xlu0 %1501
        %v1504 = vsel %vm898, %v1500, 0
        %v1507 = vsel %vm898, %v1502, 0
        %1509 = vmatpush.bf16.xpose.msra.mxu0 0
        %1510 = vmatpush.bf16.xpose.msra.mxu0 0
        %1511 = vmatpush.bf16.xpose.msra.mxu0 0
        %1512 = vmatpush.bf16.xpose.msra.mxu0 0
        %1513 = vmatpush.bf16.xpose.msra.mxu0 0
        %1514 = vmatpush.bf16.xpose.msra.mxu0 0
        %1515 = vmatpush.bf16.xpose.msra.mxu0 0
        %1516 = vmatpush.bf16.xpose.msra.mxu0 %v1507
        %1517 = vmatmul.bf16.gmra.mxu0 %v1504
        %v1518 = vpop.f32.mrf.mxu0
        %v1519 = vadd.f32 0.0, %v1518
        %v1520 = vpop.f32.mrf.mxu0
        %v1521 = vadd.f32 0.0, %v1520
        %1522 = vdwg.mxu0
        %1523 = vrot.lane.b32.xlu0 %v923, 32
        %v1524 = vpop.permute.xlu0 %1523
        %1525 = vrot.lane.b32.xlu0 %v928, 32
        %v1526 = vpop.permute.xlu0 %1525
        %v1528 = vsel %vm898, %v1524, 0
        %v1531 = vsel %vm898, %v1526, 0
        %1533 = vmatpush.bf16.xpose.msra.mxu0 0
        %1534 = vmatpush.bf16.xpose.msra.mxu0 0
        %1535 = vmatpush.bf16.xpose.msra.mxu0 0
        %1536 = vmatpush.bf16.xpose.msra.mxu0 0
        %1537 = vmatpush.bf16.xpose.msra.mxu0 0
        %1538 = vmatpush.bf16.xpose.msra.mxu0 0
        %1539 = vmatpush.bf16.xpose.msra.mxu0 0
        %1540 = vmatpush.bf16.xpose.msra.mxu0 %v1531
        %1541 = vmatmul.bf16.gmra.mxu0 %v1528
        %v1542 = vpop.f32.mrf.mxu0
        %v1543 = vadd.f32 0.0, %v1542
        %v1544 = vpop.f32.mrf.mxu0
        %v1545 = vadd.f32 0.0, %v1544
        %1546 = vdwg.mxu0
        %v1547 = vmul.f32 %v1519, 0.17677669
        %v1548 = vmul.f32 %v1521, 0.17677669
        %v1549 = vmul.f32 %v1543, 0.17677669
        %v1550 = vmul.f32 %v1545, 0.17677669
        %v1551 = vsel %vm953, %v1547, -inf
        %1552 = vmax.xlane.f32.xlu0 %v1551
        %v1553 = vpop.xlane.xlu0 %1552
        %v1554 = vsel %vm953, %v1548, -inf
        %1555 = vmax.xlane.f32.xlu0 %v1554
        %v1556 = vpop.xlane.xlu0 %1555
        %v1557 = vsel %vm953, %v1549, -inf
        %1558 = vmax.xlane.f32.xlu0 %v1557
        %v1559 = vpop.xlane.xlu0 %1558
        %v1560 = vsel %vm953, %v1550, -inf
        %1561 = vmax.xlane.f32.xlu0 %v1560
        %v1562 = vpop.xlane.xlu0 %1561
        %v1563 = vsub.f32 %v1547, %v1553
        %v1564 = vsub.f32 %v1548, %v1556
        %v1565 = vsub.f32 %v1549, %v1559
        %v1566 = vsub.f32 %v1550, %v1562
        %v1567 = vmul.f32 %v1563, 1.442695
        %v1568 = vpow.pop %v1567
        %v1569 = vmul.f32 %v1564, 1.442695
        %v1570 = vpow.pop %v1569
        %v1571 = vmul.f32 %v1565, 1.442695
        %v1572 = vpow.pop %v1571
        %v1573 = vmul.f32 %v1566, 1.442695
        %v1574 = vpow.pop %v1573
        %v1575 = vsel %vm953, %v1568, 0.0
        %1576 = vadd.xlane.f32.xlu0 %v1575
        %v1577 = vpop.xlane.xlu0 %1576
        %v1578 = vsel %vm953, %v1570, 0.0
        %1579 = vadd.xlane.f32.xlu0 %v1578
        %v1580 = vpop.xlane.xlu0 %1579
        %v1581 = vsel %vm953, %v1572, 0.0
        %1582 = vadd.xlane.f32.xlu0 %v1581
        %v1583 = vpop.xlane.xlu0 %1582
        %v1584 = vsel %vm953, %v1574, 0.0
        %1585 = vadd.xlane.f32.xlu0 %v1584
        %v1586 = vpop.xlane.xlu0 %1585
        %v1587 = vrcp.pop %v1577
        %v1588 = vrcp.pop %v1580
        %v1589 = vrcp.pop %v1583
        %v1590 = vrcp.pop %v1586
        %v1591 = vmul.f32 %v1568, %v1587
        %v1592 = vmul.f32 %v1570, %v1588
        %v1593 = vmul.f32 %v1572, %v1589
        %v1594 = vmul.f32 %v1574, %v1590
        %v1595 = vpack.c.bf16 %v1591, %v1591
        %v1596 = vpack.c.bf16 %v1592, %v1592
        %v1597 = vpack.c.bf16 %v1593, %v1593
        %v1598 = vpack.c.bf16 %v1594, %v1594
        %v1601 = vunpack.c.l.b16 %v1595
        %v1602 = vunpack.c.l.b16 %v1596
        %v1603 = vpack.c.b16 %v1602, %v1601
        %1604 = vrot.lane.b32.xlu0 %v1011, 32
        %v1605 = vpop.permute.xlu0 %1604
        %v1608 = vsel %vm953, %v1603, 0
        %1610 = vmatpush.bf16.msra.mxu0 0
        %1611 = vmatpush.bf16.msra.mxu0 0
        %1612 = vmatpush.bf16.msra.mxu0 0
        %1613 = vmatpush.bf16.msra.mxu0 0
        %1614 = vmatpush.bf16.msra.mxu0 0
        %1615 = vmatpush.bf16.msra.mxu0 0
        %1616 = vmatpush.bf16.msra.mxu0 0
        %1617 = vmatpush.bf16.msra.mxu0 %v1605
        %1618 = vmatmul.bf16.gmra.mxu0 %v1608
        %v1619 = vpop.f32.mrf.mxu0
        %v1620 = vadd.f32 0.0, %v1619
        %v1621 = vpop.f32.mrf.mxu0
        %v1622 = vadd.f32 0.0, %v1621
        %1623 = vdwg.mxu0
        %v1626 = vunpack.c.l.b16 %v1597
        %v1627 = vunpack.c.l.b16 %v1598
        %v1628 = vpack.c.b16 %v1627, %v1626
        %1629 = vrot.lane.b32.xlu0 %v1039, 32
        %v1630 = vpop.permute.xlu0 %1629
        %v1633 = vsel %vm953, %v1628, 0
        %1635 = vmatpush.bf16.msra.mxu0 0
        %1636 = vmatpush.bf16.msra.mxu0 0
        %1637 = vmatpush.bf16.msra.mxu0 0
        %1638 = vmatpush.bf16.msra.mxu0 0
        %1639 = vmatpush.bf16.msra.mxu0 0
        %1640 = vmatpush.bf16.msra.mxu0 0
        %1641 = vmatpush.bf16.msra.mxu0 0
        %1642 = vmatpush.bf16.msra.mxu0 %v1630
        %1643 = vmatmul.bf16.gmra.mxu0 %v1633
        %v1644 = vpop.f32.mrf.mxu0
        %v1645 = vadd.f32 0.0, %v1644
        %v1646 = vpop.f32.mrf.mxu0
        %v1647 = vadd.f32 0.0, %v1646
        %1648 = vdwg.mxu0
        %v1649 = vpack.c.bf16 %v1622, %v1620
        %v1650 = vpack.c.bf16 %v1647, %v1645
        %v1651 = vld [vmem:[#allocation13 + $0x30] sm:$0xf]
        %v1652 = vld [vmem:[#allocation13 + $0x34] sm:$0xf]
        %v1653 = vld [vmem:[#allocation13 + $0x38] sm:$0xf]
        %v1654 = vld [vmem:[#allocation13 + $0x3c] sm:$0xf]
        %v1659 = vunpack.c.l.b16 %v1651
        %v1660 = vunpack.c.l.b16 %v1652
        %v1661 = vunpack.c.l.b16 %v1653
        %v1662 = vunpack.c.l.b16 %v1654
        %v1663 = vpack.c.b16 %v1660, %v1659
        %v1664 = vpack.c.b16 %v1662, %v1661
        %v1668 = vsel %vm898, %v1649, 0
        %v1671 = vsel %vm898, %v1650, 0
        %1673 = vmatpush.bf16.msra.mxu0 0
        %1674 = vmatpush.bf16.msra.mxu0 0
        %1675 = vmatpush.bf16.msra.mxu0 0
        %1676 = vmatpush.bf16.msra.mxu0 0
        %1677 = vmatpush.bf16.msra.mxu0 0
        %1678 = vmatpush.bf16.msra.mxu0 0
        %1679 = vmatpush.bf16.msra.mxu0 %v1664
        %1680 = vmatpush.bf16.msra.mxu0 %v1663
        %1681 = vmatmul.bf16.gmra.mxu0 %v1668
        %v1682 = vpop.f32.mrf.mxu0
        %v1683 = vadd.f32 0.0, %v1682
        %v1684 = vpop.f32.mrf.mxu0
        %v1685 = vadd.f32 0.0, %v1684
        %1686 = vmatmul.bf16.gmra.mxu0 %v1671
        %v1687 = vpop.f32.mrf.mxu0
        %v1688 = vadd.f32 0.0, %v1687
        %v1689 = vpop.f32.mrf.mxu0
        %v1690 = vadd.f32 0.0, %v1689
        %1691 = vdwg.mxu0
        %v1692 = vadd.f32 %v1495, %v1683
        %v1693 = vadd.f32 %v1496, %v1685
        %v1694 = vadd.f32 %v1497, %v1688
        %v1695 = vadd.f32 %v1498, %v1690
        %1696 = vst [vmem:[%s556] sm:$0xff] %v1692
        %1697 = vst [vmem:[%s556 + $0x8] sm:$0xff] %v1693
        %1698 = vst [vmem:[%s556 + $0x10] sm:$0xff] %v1694
        %1699 = vst [vmem:[%s556 + $0x18] sm:$0xff] %v1695
        %s1700 = sand.u32 %s287, 1
        %s1701 = scalar_lea.sflag [#allocation4], %s1700
        %s1702 = sand.u32 %s287, 1
        %s1703 = smul.addr %s1702, 32
        %s1704 = scalar_lea.vmem [#allocation14], %s1703
        // Predicated region
        $region93: #{tpu_custom_call.1} parent=63 // pred_check
          %p1705 = pneg %p297
        $region94: #{tpu_custom_call.1} parent=63 // pred_check_branch
          %1707 = sbr.rel (%p1705) target = $region96
        $region95: #{tpu_custom_call.1} parent=63 // pred_region
          %s1708 = smul.u32 2, %s33
          %1710 = vsyncadd %s1701, 0
          %s1711 = smul.addr %s1708, 2
          %s1712 = smul.addr %s1711, 8
          %s1713 = scalar_lea.hbm %s11, %s1712
          %s1714 = sshll.u32 %s1704, 4
          %s1715 = int_to_ptr.vmem [resolvable:$true] %s1714
          %s1716 = sshll.u32 %s1713, 4
          %s1717 = int_to_ptr.hbm [resolvable:$true] %s1716
          %1722 = dma.vmem_to_hbm [thread:$0]  %s1715, 512, %s1717, %s1701, 128, 128, 8
        $region96: #{tpu_custom_call.1} parent=63 // pred_fallthru
          _
      $region64: #{tpu_custom_call.1} parent=5 // pred_fallthru
        _
      %p1723 = scmp.le.s32.totalorder 2, %s28
      // Predicated region
      $region97: #{tpu_custom_call.1} parent=5 // pred_check
        %p1724 = pneg %p1723
      $region98: #{tpu_custom_call.1} parent=5 // pred_check_branch
        %1726 = sbr.rel (%p1724) target = $region100
      $region99: #{tpu_custom_call.1} parent=5 // pred_region
        %s1727 = ssub.s32 %s28, 2
        // Predicated region
        $region101: #{tpu_custom_call.1} parent=99 // pred_check
          %p1728 = pneg %p303
        $region102: #{tpu_custom_call.1} parent=99 // pred_check_branch
          %1730 = sbr.rel (%p1728) target = $region104
        $region103: #{tpu_custom_call.1} parent=99 // pred_region
          %s1731 = sand.u32 %s288, 1
          %s1732 = scalar_lea.sflag [#allocation4], %s1731
          %s1733 = sand.u32 %s288, 1
          %s1734 = smul.addr %s1733, 32
          %s1735 = scalar_lea.vmem [#allocation14], %s1734
          %1737 = dma.done %s1732, 512
        $region104: #{tpu_custom_call.1} parent=99 // pred_fallthru
          _
      $region100: #{tpu_custom_call.1} parent=5 // pred_fallthru
        _
    $region6: #{tpu_custom_call.1} parent=1 // loop_footer
      %s32 = sadd.s32 1, %s28
    $region7: #{tpu_custom_call.1} parent=1 // loop_footer_branch
      %27 = sbr.rel target = $region3
    $region8: #{tpu_custom_call.1} parent=1 // loop_exit
      _
    %1738 = vsyncpa [#allocation3], 1
    %s1739 = scalar_lea.sflag [#allocation3], 1
    %1740 = vsyncpa %s1739, 1
    %1741 = vsyncpa [#allocation6], 1
    %s1742 = scalar_lea.sflag [#allocation6], 1
    %1743 = vsyncpa %s1742, 1
    %1744 = vsyncpa [#allocation9], 1
    %1745 = vsyncpa [#allocation12], 1
    %1746 = vsyncpa [#allocation4], 1
    %s1747 = scalar_lea.sflag [#allocation4], 1
    %1748 = vsyncpa %s1747, 1

</llo_original>
